<compile_context>
chip_gen: v5e
topology: v5e:2x2
jax: 0.10.0
libtpu: 0.0.40
codegen_flags: <defaults>
</compile_context>

<pallas_src>
import functools

import jax
import jax.numpy as jnp
from jax.experimental import pallas as pl
from jax.experimental.pallas import tpu as pltpu

LN_EPS = 1e-5          # PyTorch nn.LayerNorm default
LANES = 128
TILE_MAX_ROWS = 256    # max batch-tile rows (keeps live activations <=32 vregs)


def _pad_to(n, m):
    return ((n + m - 1) // m) * m


def _cdiv(a, b):
    return (a + b - 1) // b


def _next_pow2(n):
    p = 1
    while p < n:
        p *= 2
    return p


# ----------------------------------------------------------------------------
# Kernel
# ----------------------------------------------------------------------------
def mlp_kernel(x_ref, w1_ref, wm_ref, wl_ref, b_ref, g_ref, bt_ref, bl_ref,
               ones_ref, o_ref, *, h_real, group_matmul):
    """Fused 9-layer MLP on one packed batch tile.

    x_ref   : [tile_rows, P]   (G batch rows per lane row, padded lanes = 0)
    w1_ref  : [P, P]           block-diagonal layer-1 weight
    wm_ref  : [7, P, P]        block-diagonal mid-layer weights
    wl_ref  : [P, P]           block-diagonal final weight
    b_ref   : [8, 1, P]        tiled biases (layers 1..8)
    g_ref   : [8, 1, P]        tiled LayerNorm gamma (padded lanes = 0)
    bt_ref  : [8, 1, P]        tiled LayerNorm beta  (padded lanes = 0)
    bl_ref  : [1, P]           tiled final bias
    ones_ref: [P, P]           block-diagonal ones (group-sum operator)
    o_ref   : [tile_rows, P]
    """
    inv_h = jnp.float32(1.0 / h_real)
    hi = jax.lax.Precision.HIGHEST

    def group_sums(h):
        # Per-group sums, broadcast back to every lane of the group.
        if group_matmul:
            ones_bd = ones_ref[...]
            s1 = jnp.dot(h, ones_bd, precision=hi,
                         preferred_element_type=jnp.float32)
            s2 = jnp.dot(h * h, ones_bd, precision=hi,
                         preferred_element_type=jnp.float32)
        else:  # single group spanning all lanes -> plain lane reduction
            s1 = jnp.sum(h, axis=-1, keepdims=True)
            s2 = jnp.sum(h * h, axis=-1, keepdims=True)
        return s1, s2

    def ln_tanh(h, i):
        # Padded lanes of h are exactly 0 after the block-diagonal matmul, so
        # group sums equal sums over the real features (mask-free statistics).
        s1, s2 = group_sums(h)
        mean = s1 * inv_h
        var = s2 * inv_h - mean * mean
        h = (h - mean) * jax.lax.rsqrt(var + LN_EPS)
        h = h * g_ref[i] + bt_ref[i]     # padded gamma/beta = 0 -> re-zero pads
        return jnp.tanh(h)

    h = x_ref[...].astype(jnp.float32)

    # layer 1
    h = jnp.dot(h, w1_ref[...], precision=hi,
                preferred_element_type=jnp.float32) + b_ref[0]
    h = ln_tanh(h, 0)

    # layers 2..8 (stacked weights, dynamic first-axis indexing)
    def mid_layer(i, h):
        h = jnp.dot(h, wm_ref[i], precision=hi,
                    preferred_element_type=jnp.float32) + b_ref[i + 1]
        return ln_tanh(h, i + 1)

    h = jax.lax.fori_loop(0, 7, mid_layer, h)

    # layer 9: final Linear, no norm / activation
    h = jnp.dot(h, wl_ref[...], precision=hi,
                preferred_element_type=jnp.float32) + bl_ref[...]
    o_ref[...] = h.astype(o_ref.dtype)


# ----------------------------------------------------------------------------
# Parameter packing
# ----------------------------------------------------------------------------
def pack_params(params, input_size, hidden_size, output_size):
    """Pack per-layer params into block-diagonal / tiled 128-lane layouts."""
    max_dim = max(input_size, hidden_size, output_size)
    if max_dim <= LANES:
        S = max(8, _next_pow2(max_dim))   # per-group lane span
        G = LANES // S                    # batch rows packed per lane row
    else:
        S = _pad_to(max_dim, LANES)
        G = 1
    P = G * S

    ws, bs = params["weights"], params["biases"]
    gs, bts = params["ln_gamma"], params["ln_beta"]
    eye = jnp.eye(G, dtype=jnp.float32)

    def bdiag(w):
        blk = jnp.zeros((S, S), jnp.float32).at[: w.shape[0], : w.shape[1]].set(w)
        return jnp.kron(eye, blk)                                  # [P, P]

    def tile_row(v):
        v = jnp.asarray(v, jnp.float32).reshape(-1)
        row = jnp.zeros((S,), jnp.float32).at[: v.shape[0]].set(v)
        return jnp.tile(row, (G,)).reshape(1, P)                   # [1, P]

    ones_bd = jnp.kron(eye, jnp.ones((S, S), jnp.float32))         # [P, P]

    return dict(
        w_first=bdiag(ws[0]),
        w_mid=jnp.stack([bdiag(ws[i]) for i in range(1, 8)]),      # [7, P, P]
        w_last=bdiag(ws[8]),
        b_mid=jnp.stack([tile_row(bs[i]) for i in range(8)]),      # [8, 1, P]
        gamma=jnp.stack([tile_row(gs[i]) for i in range(8)]),      # [8, 1, P]
        beta=jnp.stack([tile_row(bts[i]) for i in range(8)]),      # [8, 1, P]
        b_last=tile_row(bs[8]),                                    # [1, P]
        ones_bd=ones_bd,
        S=S, G=G, P=P,
        sizes=(input_size, hidden_size, output_size),
    )


# ----------------------------------------------------------------------------
# Wrapper
# ----------------------------------------------------------------------------
def mlp_forward(x, packed, *, tile_rows=None):
    """x: [B, input_size] float32. packed: output of pack_params."""
    B, in_size = x.shape
    S, G, P = packed["S"], packed["G"], packed["P"]
    input_size, hidden_size, output_size = packed["sizes"]
    assert in_size == input_size

    # ---- pack G batch rows per 128-lane row (no lane-pad to 128 in HBM) ----
    x_s = x.astype(jnp.float32)
    if in_size < S:
        x_s = jnp.pad(x_s, ((0, 0), (0, S - in_size)))
    B_g = _pad_to(B, G)
    if B_g != B:
        x_s = jnp.pad(x_s, ((0, B_g - B), (0, 0)))
    rows = B_g // G
    x_packed = x_s.reshape(rows, P)

    # ---- batch tiling: minimal padding, capped tile, even #steps for v7x ----
    rows8 = _pad_to(rows, 8)
    if tile_rows is None:
        n_steps = _cdiv(rows8, TILE_MAX_ROWS)
        if rows8 > 8:
            n_steps = max(n_steps, 2)       # let v7x's 2 TCs both get work
        if n_steps > 1 and n_steps % 2:
            n_steps += 1                    # even split across 2 TCs
        tile_rows = _pad_to(_cdiv(rows8, n_steps), 8)
    tile_rows = _pad_to(tile_rows, 8)
    rows_pad = _pad_to(rows8, tile_rows)
    if rows_pad != rows:
        x_packed = jnp.pad(x_packed, ((0, rows_pad - rows), (0, 0)))
    grid = (rows_pad // tile_rows,)

    kernel = functools.partial(mlp_kernel, h_real=hidden_size,
                               group_matmul=(G > 1))

    # Full-array parameter blocks with constant index_maps -> stay resident.
    # (pl.Buffered(1) would halve their VMEM; negligible at P=128 so skipped.)
    full2 = lambda a: pl.BlockSpec(a.shape, lambda i: (0, 0))
    full3 = lambda a: pl.BlockSpec(a.shape, lambda i: (0, 0, 0))

    # TODO(synk): if hidden_size is ever scaled past ~768, stream w_mid over an
    # extra "arbitrary" grid axis (or raise vmem_limit_bytes) for v5e/v7x VMEM.
    out = pl.pallas_call(
        kernel,
        out_shape=jax.ShapeDtypeStruct((rows_pad, P), jnp.float32),
        grid_spec=pltpu.PrefetchScalarGridSpec(
            num_scalar_prefetch=0,
            grid=grid,
            in_specs=[
                pl.BlockSpec((tile_rows, P), lambda i: (i, 0)),   # x tile
                full2(packed["w_first"]),
                full3(packed["w_mid"]),
                full2(packed["w_last"]),
                full3(packed["b_mid"]),
                full3(packed["gamma"]),
                full3(packed["beta"]),
                full2(packed["b_last"]),
                full2(packed["ones_bd"]),
            ],
            out_specs=pl.BlockSpec((tile_rows, P), lambda i: (i, 0)),
        ),
        compiler_params=pltpu.CompilerParams(
            dimension_semantics=("parallel",)),
    )(x_packed, packed["w_first"], packed["w_mid"], packed["w_last"],
      packed["b_mid"], packed["gamma"], packed["beta"], packed["b_last"],
      packed["ones_bd"])

    # Unpack: each 128-lane row holds G batch rows; the first output_size
    # lanes of each S-span are the real outputs.
    out = out[:rows].reshape(rows * G, S)[:B, :output_size]
    return out


# ----------------------------------------------------------------------------
# Param init (matches the PyTorch module) + pure-JAX reference
# ----------------------------------------------------------------------------
def xavier_uniform(key, fan_in, fan_out):
    bound = jnp.sqrt(6.0 / (fan_in + fan_out))
    return jax.random.uniform(key, (fan_in, fan_out), jnp.float32, -bound, bound)


def init_params(key, input_size, hidden_size, output_size):
    dims = [input_size] + [hidden_size] * 8 + [output_size]
    keys = jax.random.split(key, 9)
    weights, biases = [], []
    for i in range(9):
        weights.append(xavier_uniform(keys[i], dims[i], dims[i + 1]))
        biases.append(jnp.zeros((1, dims[i + 1]), jnp.float32))
    ln_gamma = [jnp.ones((1, hidden_size), jnp.float32) for _ in range(8)]
    ln_beta = [jnp.zeros((1, hidden_size), jnp.float32) for _ in range(8)]
    return dict(weights=weights, biases=biases, ln_gamma=ln_gamma, ln_beta=ln_beta)


def mlp_reference(x, params):
    hi = jax.lax.Precision.HIGHEST   # true-f32 matmuls, same as PyTorch f32
    h = x
    for i in range(8):
        h = jnp.dot(h, params["weights"][i], precision=hi) + params["biases"][i]
        mean = jnp.mean(h, axis=-1, keepdims=True)
        var = jnp.mean((h - mean) ** 2, axis=-1, keepdims=True)
        h = (h - mean) / jnp.sqrt(var + LN_EPS)
        h = h * params["ln_gamma"][i] + params["ln_beta"][i]
        h = jnp.tanh(h)
    return jnp.dot(h, params["weights"][8], precision=hi) + params["biases"][8]


if __name__ == "__main__":
    input_size, hidden_size, output_size = 32, 32, 16
    batch = 16

    key = jax.random.PRNGKey(0)
    k_param, k_x = jax.random.split(key)
    params = init_params(k_param, input_size, hidden_size, output_size)
    x = jax.random.normal(k_x, (batch, input_size), jnp.float32)

    packed = pack_params(params, input_size, hidden_size, output_size)
    out = jax.block_until_ready(mlp_forward(x, packed))

    ref = mlp_reference(x, params)
    assert out.shape == (batch, output_size)
    max_err = float(jnp.max(jnp.abs(out - ref)))
    assert jnp.allclose(out, ref, atol=1e-4, rtol=1e-4), f"max abs err = {max_err}"
    print("KERNEL_OK")
</pallas_src>

<mosaic_0001>
module attributes {stable_mosaic.version = 11 : i64} {
  func.func @mlp_kernel(%arg0: i32, %arg1: memref<8x128xf32, #tpu.memory_space<vmem>>, %arg2: memref<128x128xf32, #tpu.memory_space<vmem>>, %arg3: memref<7x128x128xf32, #tpu.memory_space<vmem>>, %arg4: memref<128x128xf32, #tpu.memory_space<vmem>>, %arg5: memref<8x1x128xf32, #tpu.memory_space<vmem>>, %arg6: memref<8x1x128xf32, #tpu.memory_space<vmem>>, %arg7: memref<8x1x128xf32, #tpu.memory_space<vmem>>, %arg8: memref<1x128xf32, #tpu.memory_space<vmem>>, %arg9: memref<128x128xf32, #tpu.memory_space<vmem>>, %arg10: memref<8x128xf32, #tpu.memory_space<vmem>>) attributes {dimension_semantics = [#tpu.dimension_semantics<parallel>], iteration_bounds = array<i64: 1>, scalar_prefetch = 0 : i64, scratch_operands = 0 : i64, tpu.core_type = #tpu.core_type<tc>, window_params = [{transform_indices = @transform_0, window_bounds = array<i64: 8, 128>}, {pipeline_mode = #tpu.pipeline_mode<synchronous>, transform_indices = @transform_1, window_bounds = array<i64: 128, 128>}, {pipeline_mode = #tpu.pipeline_mode<synchronous>, transform_indices = @transform_2, window_bounds = array<i64: 7, 128, 128>}, {pipeline_mode = #tpu.pipeline_mode<synchronous>, transform_indices = @transform_3, window_bounds = array<i64: 128, 128>}, {pipeline_mode = #tpu.pipeline_mode<synchronous>, transform_indices = @transform_4, window_bounds = array<i64: 8, 1, 128>}, {pipeline_mode = #tpu.pipeline_mode<synchronous>, transform_indices = @transform_5, window_bounds = array<i64: 8, 1, 128>}, {pipeline_mode = #tpu.pipeline_mode<synchronous>, transform_indices = @transform_6, window_bounds = array<i64: 8, 1, 128>}, {pipeline_mode = #tpu.pipeline_mode<synchronous>, transform_indices = @transform_7, window_bounds = array<i64: 1, 128>}, {pipeline_mode = #tpu.pipeline_mode<synchronous>, transform_indices = @transform_8, window_bounds = array<i64: 128, 128>}, {transform_indices = @transform_9, window_bounds = array<i64: 8, 128>}]} {
    %c0 = arith.constant 0 : index
    %c0_0 = arith.constant 0 : index
    %0 = vector.load %arg1[%c0, %c0_0] : memref<8x128xf32, #tpu.memory_space<vmem>>, vector<8x128xf32>
    %c0_1 = arith.constant 0 : index
    %c0_2 = arith.constant 0 : index
    %1 = vector.load %arg2[%c0_1, %c0_2] : memref<128x128xf32, #tpu.memory_space<vmem>>, vector<128x128xf32>
    %cst = arith.constant dense<0.000000e+00> : vector<8x128xf32>
    %2 = tpu.matmul %0, %1, %cst {dimension_numbers = #tpu.dot_dimension_numbers<[1], [0], [0], [1], [0, 0, 1, 1], [], []>, precision = #tpu.contract_precision<fp32>} : vector<8x128xf32>, vector<128x128xf32>, vector<8x128xf32> -> vector<8x128xf32>
    %c0_3 = arith.constant 0 : index
    %c0_4 = arith.constant 0 : index
    %c0_5 = arith.constant 0 : index
    %3 = vector.load %arg5[%c0_3, %c0_4, %c0_5] : memref<8x1x128xf32, #tpu.memory_space<vmem>>, vector<1x1x128xf32>
    %4 = vector.shape_cast %3 : vector<1x1x128xf32> to vector<1x128xf32>
    %5 = vector.broadcast %4 : vector<1x128xf32> to vector<8x128xf32>
    %6 = arith.addf %2, %5 : vector<8x128xf32>
    %c0_6 = arith.constant 0 : index
    %c0_7 = arith.constant 0 : index
    %7 = vector.load %arg9[%c0_6, %c0_7] : memref<128x128xf32, #tpu.memory_space<vmem>>, vector<128x128xf32>
    %cst_8 = arith.constant dense<0.000000e+00> : vector<8x128xf32>
    %8 = tpu.matmul %6, %7, %cst_8 {dimension_numbers = #tpu.dot_dimension_numbers<[1], [0], [0], [1], [0, 0, 1, 1], [], []>, precision = #tpu.contract_precision<fp32>} : vector<8x128xf32>, vector<128x128xf32>, vector<8x128xf32> -> vector<8x128xf32>
    %9 = arith.mulf %6, %6 : vector<8x128xf32>
    %cst_9 = arith.constant dense<0.000000e+00> : vector<8x128xf32>
    %10 = tpu.matmul %9, %7, %cst_9 {dimension_numbers = #tpu.dot_dimension_numbers<[1], [0], [0], [1], [0, 0, 1, 1], [], []>, precision = #tpu.contract_precision<fp32>} : vector<8x128xf32>, vector<128x128xf32>, vector<8x128xf32> -> vector<8x128xf32>
    %cst_10 = arith.constant 3.125000e-02 : f32
    %11 = vector.broadcast %cst_10 : f32 to vector<8x128xf32>
    %12 = arith.mulf %8, %11 : vector<8x128xf32>
    %cst_11 = arith.constant 3.125000e-02 : f32
    %13 = vector.broadcast %cst_11 : f32 to vector<8x128xf32>
    %14 = arith.mulf %10, %13 : vector<8x128xf32>
    %15 = arith.mulf %12, %12 : vector<8x128xf32>
    %16 = arith.subf %14, %15 : vector<8x128xf32>
    %17 = arith.subf %6, %12 : vector<8x128xf32>
    %cst_12 = arith.constant 9.99999974E-6 : f32
    %18 = vector.broadcast %cst_12 : f32 to vector<8x128xf32>
    %19 = arith.addf %16, %18 : vector<8x128xf32>
    %20 = math.rsqrt %19 : vector<8x128xf32>
    %21 = arith.mulf %17, %20 : vector<8x128xf32>
    %c0_13 = arith.constant 0 : index
    %c0_14 = arith.constant 0 : index
    %c0_15 = arith.constant 0 : index
    %22 = vector.load %arg6[%c0_13, %c0_14, %c0_15] : memref<8x1x128xf32, #tpu.memory_space<vmem>>, vector<1x1x128xf32>
    %23 = vector.shape_cast %22 : vector<1x1x128xf32> to vector<1x128xf32>
    %24 = vector.broadcast %23 : vector<1x128xf32> to vector<8x128xf32>
    %25 = arith.mulf %21, %24 : vector<8x128xf32>
    %c0_16 = arith.constant 0 : index
    %c0_17 = arith.constant 0 : index
    %c0_18 = arith.constant 0 : index
    %26 = vector.load %arg7[%c0_16, %c0_17, %c0_18] : memref<8x1x128xf32, #tpu.memory_space<vmem>>, vector<1x1x128xf32>
    %27 = vector.shape_cast %26 : vector<1x1x128xf32> to vector<1x128xf32>
    %28 = vector.broadcast %27 : vector<1x128xf32> to vector<8x128xf32>
    %29 = arith.addf %25, %28 : vector<8x128xf32>
    %30 = math.tanh %29 : vector<8x128xf32>
    %cst_19 = arith.constant 3.125000e-02 : f32
    %c0_i32 = arith.constant 0 : i32
    %c7_i32 = arith.constant 7 : i32
    %31 = arith.addi %c0_i32, %c7_i32 : i32
    %c1_i32 = arith.constant 1 : i32
    %32 = scf.for %arg11 = %c0_i32 to %31 step %c1_i32 iter_args(%arg12 = %30) -> (vector<8x128xf32>)  : i32 {
      %39 = arith.index_cast %arg11 : i32 to index
      %c0_28 = arith.constant 0 : index
      %c0_29 = arith.constant 0 : index
      %40 = vector.load %arg3[%39, %c0_28, %c0_29] : memref<7x128x128xf32, #tpu.memory_space<vmem>>, vector<1x128x128xf32>
      %41 = vector.shape_cast %40 : vector<1x128x128xf32> to vector<128x128xf32>
      %cst_30 = arith.constant dense<0.000000e+00> : vector<8x128xf32>
      %42 = tpu.matmul %arg12, %41, %cst_30 {dimension_numbers = #tpu.dot_dimension_numbers<[1], [0], [0], [1], [0, 0, 1, 1], [], []>, precision = #tpu.contract_precision<fp32>} : vector<8x128xf32>, vector<128x128xf32>, vector<8x128xf32> -> vector<8x128xf32>
      %c1_i32_31 = arith.constant 1 : i32
      %43 = arith.addi %arg11, %c1_i32_31 : i32
      %44 = arith.index_cast %43 : i32 to index
      %c0_32 = arith.constant 0 : index
      %c0_33 = arith.constant 0 : index
      %45 = vector.load %arg5[%44, %c0_32, %c0_33] : memref<8x1x128xf32, #tpu.memory_space<vmem>>, vector<1x1x128xf32>
      %46 = vector.shape_cast %45 : vector<1x1x128xf32> to vector<1x128xf32>
      %47 = vector.broadcast %46 : vector<1x128xf32> to vector<8x128xf32>
      %48 = arith.addf %42, %47 : vector<8x128xf32>
      %c1_i32_34 = arith.constant 1 : i32
      %49 = arith.addi %arg11, %c1_i32_34 : i32
      %c0_35 = arith.constant 0 : index
      %c0_36 = arith.constant 0 : index
      %50 = vector.load %arg9[%c0_35, %c0_36] : memref<128x128xf32, #tpu.memory_space<vmem>>, vector<128x128xf32>
      %cst_37 = arith.constant dense<0.000000e+00> : vector<8x128xf32>
      %51 = tpu.matmul %48, %50, %cst_37 {dimension_numbers = #tpu.dot_dimension_numbers<[1], [0], [0], [1], [0, 0, 1, 1], [], []>, precision = #tpu.contract_precision<fp32>} : vector<8x128xf32>, vector<128x128xf32>, vector<8x128xf32> -> vector<8x128xf32>
      %52 = arith.mulf %48, %48 : vector<8x128xf32>
      %cst_38 = arith.constant dense<0.000000e+00> : vector<8x128xf32>
      %53 = tpu.matmul %52, %50, %cst_38 {dimension_numbers = #tpu.dot_dimension_numbers<[1], [0], [0], [1], [0, 0, 1, 1], [], []>, precision = #tpu.contract_precision<fp32>} : vector<8x128xf32>, vector<128x128xf32>, vector<8x128xf32> -> vector<8x128xf32>
      %54 = vector.broadcast %cst_19 : f32 to vector<8x128xf32>
      %55 = arith.mulf %51, %54 : vector<8x128xf32>
      %56 = vector.broadcast %cst_19 : f32 to vector<8x128xf32>
      %57 = arith.mulf %53, %56 : vector<8x128xf32>
      %58 = arith.mulf %55, %55 : vector<8x128xf32>
      %59 = arith.subf %57, %58 : vector<8x128xf32>
      %60 = arith.subf %48, %55 : vector<8x128xf32>
      %cst_39 = arith.constant 9.99999974E-6 : f32
      %61 = vector.broadcast %cst_39 : f32 to vector<8x128xf32>
      %62 = arith.addf %59, %61 : vector<8x128xf32>
      %63 = math.rsqrt %62 : vector<8x128xf32>
      %64 = arith.mulf %60, %63 : vector<8x128xf32>
      %65 = arith.index_cast %49 : i32 to index
      %c0_40 = arith.constant 0 : index
      %c0_41 = arith.constant 0 : index
      %66 = vector.load %arg6[%65, %c0_40, %c0_41] : memref<8x1x128xf32, #tpu.memory_space<vmem>>, vector<1x1x128xf32>
      %67 = vector.shape_cast %66 : vector<1x1x128xf32> to vector<1x128xf32>
      %68 = vector.broadcast %67 : vector<1x128xf32> to vector<8x128xf32>
      %69 = arith.mulf %64, %68 : vector<8x128xf32>
      %70 = arith.index_cast %49 : i32 to index
      %c0_42 = arith.constant 0 : index
      %c0_43 = arith.constant 0 : index
      %71 = vector.load %arg7[%70, %c0_42, %c0_43] : memref<8x1x128xf32, #tpu.memory_space<vmem>>, vector<1x1x128xf32>
      %72 = vector.shape_cast %71 : vector<1x1x128xf32> to vector<1x128xf32>
      %73 = vector.broadcast %72 : vector<1x128xf32> to vector<8x128xf32>
      %74 = arith.addf %69, %73 : vector<8x128xf32>
      %75 = math.tanh %74 : vector<8x128xf32>
      scf.yield %75 : vector<8x128xf32>
    }
    %c7_i32_20 = arith.constant 7 : i32
    %c0_21 = arith.constant 0 : index
    %c0_22 = arith.constant 0 : index
    %33 = vector.load %arg4[%c0_21, %c0_22] : memref<128x128xf32, #tpu.memory_space<vmem>>, vector<128x128xf32>
    %cst_23 = arith.constant dense<0.000000e+00> : vector<8x128xf32>
    %34 = tpu.matmul %32, %33, %cst_23 {dimension_numbers = #tpu.dot_dimension_numbers<[1], [0], [0], [1], [0, 0, 1, 1], [], []>, precision = #tpu.contract_precision<fp32>} : vector<8x128xf32>, vector<128x128xf32>, vector<8x128xf32> -> vector<8x128xf32>
    %c0_24 = arith.constant 0 : index
    %c0_25 = arith.constant 0 : index
    %35 = vector.load %arg8[%c0_24, %c0_25] : memref<1x128xf32, #tpu.memory_space<vmem>>, vector<1x128xf32>
    %36 = vector.broadcast %35 : vector<1x128xf32> to vector<8x128xf32>
    %37 = arith.addf %34, %36 : vector<8x128xf32>
    %c0_26 = arith.constant 0 : index
    %c0_27 = arith.constant 0 : index
    %38 = vector.load %arg10[%c0_26, %c0_27] : memref<8x128xf32, #tpu.memory_space<vmem>>, vector<8x128xf32>
    tpu.vector_store %arg10[%c0_26, %c0_27], %37 {strides = array<i32>} : memref<8x128xf32, #tpu.memory_space<vmem>>, vector<8x128xf32>,
    return
  }
  func.func @transform_0(%arg0: i32) -> (i32, i32) {
    %c0_i32 = arith.constant 0 : i32
    %c0_i32_0 = arith.constant 0 : i32
    return %arg0, %c0_i32 : i32, i32
  }
  func.func @transform_1(%arg0: i32) -> (i32, i32) {
    %c0_i32 = arith.constant 0 : i32
    %c0_i32_0 = arith.constant 0 : i32
    %c0_i32_1 = arith.constant 0 : i32
    return %c0_i32, %c0_i32_0 : i32, i32
  }
  func.func @transform_2(%arg0: i32) -> (i32, i32, i32) {
    %c0_i32 = arith.constant 0 : i32
    %c0_i32_0 = arith.constant 0 : i32
    %c0_i32_1 = arith.constant 0 : i32
    %c0_i32_2 = arith.constant 0 : i32
    return %c0_i32, %c0_i32_0, %c0_i32_1 : i32, i32, i32
  }
  func.func @transform_3(%arg0: i32) -> (i32, i32) {
    %c0_i32 = arith.constant 0 : i32
    %c0_i32_0 = arith.constant 0 : i32
    %c0_i32_1 = arith.constant 0 : i32
    return %c0_i32, %c0_i32_0 : i32, i32
  }
  func.func @transform_4(%arg0: i32) -> (i32, i32, i32) {
    %c0_i32 = arith.constant 0 : i32
    %c0_i32_0 = arith.constant 0 : i32
    %c0_i32_1 = arith.constant 0 : i32
    %c0_i32_2 = arith.constant 0 : i32
    return %c0_i32, %c0_i32_0, %c0_i32_1 : i32, i32, i32
  }
  func.func @transform_5(%arg0: i32) -> (i32, i32, i32) {
    %c0_i32 = arith.constant 0 : i32
    %c0_i32_0 = arith.constant 0 : i32
    %c0_i32_1 = arith.constant 0 : i32
    %c0_i32_2 = arith.constant 0 : i32
    return %c0_i32, %c0_i32_0, %c0_i32_1 : i32, i32, i32
  }
  func.func @transform_6(%arg0: i32) -> (i32, i32, i32) {
    %c0_i32 = arith.constant 0 : i32
    %c0_i32_0 = arith.constant 0 : i32
    %c0_i32_1 = arith.constant 0 : i32
    %c0_i32_2 = arith.constant 0 : i32
    return %c0_i32, %c0_i32_0, %c0_i32_1 : i32, i32, i32
  }
  func.func @transform_7(%arg0: i32) -> (i32, i32) {
    %c0_i32 = arith.constant 0 : i32
    %c0_i32_0 = arith.constant 0 : i32
    %c0_i32_1 = arith.constant 0 : i32
    return %c0_i32, %c0_i32_0 : i32, i32
  }
  func.func @transform_8(%arg0: i32) -> (i32, i32) {
    %c0_i32 = arith.constant 0 : i32
    %c0_i32_0 = arith.constant 0 : i32
    %c0_i32_1 = arith.constant 0 : i32
    return %c0_i32, %c0_i32_0 : i32, i32
  }
  func.func @transform_9(%arg0: i32) -> (i32, i32) {
    %c0_i32 = arith.constant 0 : i32
    %c0_i32_0 = arith.constant 0 : i32
    return %arg0, %c0_i32 : i32, i32
  }
}

</mosaic_0001>

<llo_original>
// kernel: tpu_custom_call.1
$region0: #{tpu_custom_call.1}
  #allocation0 [shape = 'u32[]', space=smem, size = 0x4, offset = 0x4, fixed_abs, tag = 'smem constant byte address 0x4 - core index']
  #allocation1 [shape = 'u32[72,128]{1,0:T(1,128)}', space=vmem, size = 0x9000, scoped, tag = 'internal scratch']
  %s0 = inlined_call_operand.hbm [shape: f32[8,128], index: 0, kind: input, shape index: {}]
  %s1 = inlined_call_operand.hbm [shape: f32[128,128], index: 1, kind: input, shape index: {}]
  %s2 = inlined_call_operand.hbm [shape: f32[7,128,128], index: 2, kind: input, shape index: {}]
  %s3 = inlined_call_operand.hbm [shape: f32[128,128], index: 3, kind: input, shape index: {}]
  %s4 = inlined_call_operand.hbm [shape: f32[8,1,128], index: 4, kind: input, shape index: {}]
  %s5 = inlined_call_operand.hbm [shape: f32[8,1,128], index: 5, kind: input, shape index: {}]
  %s6 = inlined_call_operand.hbm [shape: f32[8,1,128], index: 6, kind: input, shape index: {}]
  %s7 = inlined_call_operand.vmem [shape: f32[1,128], index: 7, kind: input, shape index: {}]
  %s8 = inlined_call_operand.hbm [shape: f32[128,128], index: 8, kind: input, shape index: {}]
  %s9 = inlined_call_operand.hbm [shape: f32[8,128], index: 9, kind: output, shape index: {}]
  %s10 = sld [smem:[#allocation0]]
  $region85: #{tpu_custom_call.1} parent=0
    _
  %s12 = ssub.s32 1, %s10
  %s13 = scalar_select 0, %s12, %s10
  $region1: #{tpu_custom_call.1} parent=0
    #allocation2 [shape = 'u8[4096]{0}', space=vmem, size = 0x1000, scoped, tag = 'input window, operand 0, single buffered']
    #allocation3 [shape = 's32[1]{0}', space=sflag, size = 0x4, scoped, tag = 'scoped memory for tpu_custom_call.1']
    #allocation4 [shape = 's32[1]{0}', space=sflag, size = 0x4, scoped, tag = 'scoped memory for tpu_custom_call.1']
    #allocation5 [shape = 'u8[65536]{0}', space=vmem, size = 0x10000, scoped, tag = 'input window, operand 1, single buffered']
    #allocation6 [shape = 's32[1]{0}', space=sflag, size = 0x4, scoped, tag = 'scoped memory for tpu_custom_call.1']
    #allocation7 [shape = 'u8[458752]{0}', space=vmem, size = 0x70000, scoped, tag = 'input window, operand 2, single buffered']
    #allocation8 [shape = 'u8[65536]{0}', space=vmem, size = 0x10000, scoped, tag = 'input window, operand 3, single buffered']
    #allocation9 [shape = 's32[1]{0}', space=sflag, size = 0x4, scoped, tag = 'scoped memory for tpu_custom_call.1']
    #allocation10 [shape = 'u8[4096]{0}', space=vmem, size = 0x1000, scoped, tag = 'input window, operand 4, single buffered']
    #allocation11 [shape = 'u8[4096]{0}', space=vmem, size = 0x1000, scoped, tag = 'input window, operand 5, single buffered']
    #allocation12 [shape = 's32[1]{0}', space=sflag, size = 0x4, scoped, tag = 'scoped memory for tpu_custom_call.1']
    #allocation13 [shape = 'u8[4096]{0}', space=vmem, size = 0x1000, scoped, tag = 'input window, operand 6, single buffered']
    #allocation14 [shape = 'u8[65536]{0}', space=vmem, size = 0x10000, scoped, tag = 'input window, operand 8, single buffered']
    #allocation15 [shape = 's32[1]{0}', space=sflag, size = 0x4, scoped, tag = 'scoped memory for tpu_custom_call.1']
    #allocation16 [shape = 'u8[4096]{0}', space=vmem, size = 0x1000, scoped, tag = 'output window, operand 0, single buffered']
    %14 = vsyncpa [#allocation3], 0
    %15 = vsyncpa [#allocation6], 0
    %16 = vsyncpa [#allocation9], 0
    %17 = vsyncpa [#allocation12], 0
    %18 = vsyncpa [#allocation15], 0
    %19 = vsyncpa [#allocation4], 0
    // Predicated region
    $region2: #{tpu_custom_call.1} parent=1 // pred_check
      _
    $region3: #{tpu_custom_call.1} parent=1 // pred_check_branch
      %21 = sbr.rel (0) target = $region5
    $region4: #{tpu_custom_call.1} parent=1 // pred_region
      %23 = vsyncadd [#allocation3], 0
      %s25 = sshll.u32 %s0, 4
      %s26 = int_to_ptr.hbm [resolvable:$true] %s25
      %s27 = sshll.u32 [#allocation2], 4
      %s28 = int_to_ptr.vmem [resolvable:$true] %s27
      %30 = dma.hbm_to_vmem [thread:$0]  %s26, 128, %s28, [#allocation3]
    $region5: #{tpu_custom_call.1} parent=1 // pred_fallthru
      _
    // Predicated region
    $region6: #{tpu_custom_call.1} parent=1 // pred_check
      _
    $region7: #{tpu_custom_call.1} parent=1 // pred_check_branch
      %32 = sbr.rel (0) target = $region9
    $region8: #{tpu_custom_call.1} parent=1 // pred_region
      %34 = vsyncadd [#allocation6], 0
      %s35 = sshll.u32 %s1, 4
      %s36 = int_to_ptr.hbm [resolvable:$true] %s35
      %s37 = sshll.u32 [#allocation5], 4
      %s38 = int_to_ptr.vmem [resolvable:$true] %s37
      %43 = dma.hbm_to_vmem [thread:$0]  %s36, 2048, %s38, [#allocation6], 128, 128, 8
    $region9: #{tpu_custom_call.1} parent=1 // pred_fallthru
      _
    // Predicated region
    $region10: #{tpu_custom_call.1} parent=1 // pred_check
      _
    $region11: #{tpu_custom_call.1} parent=1 // pred_check_branch
      %45 = sbr.rel (0) target = $region13
    $region12: #{tpu_custom_call.1} parent=1 // pred_region
      %47 = vsyncadd [#allocation6], 0
      %s48 = sshll.u32 %s2, 4
      %s49 = int_to_ptr.hbm [resolvable:$true] %s48
      %s50 = sshll.u32 [#allocation7], 4
      %s51 = int_to_ptr.vmem [resolvable:$true] %s50
      %56 = dma.hbm_to_vmem [thread:$0]  %s49, 14336, %s51, [#allocation6], 128, 128, 8
    $region13: #{tpu_custom_call.1} parent=1 // pred_fallthru
      _
    // Predicated region
    $region14: #{tpu_custom_call.1} parent=1 // pred_check
      _
    $region15: #{tpu_custom_call.1} parent=1 // pred_check_branch
      %58 = sbr.rel (0) target = $region17
    $region16: #{tpu_custom_call.1} parent=1 // pred_region
      %60 = vsyncadd [#allocation9], 0
      %s61 = sshll.u32 %s3, 4
      %s62 = int_to_ptr.hbm [resolvable:$true] %s61
      %s63 = sshll.u32 [#allocation8], 4
      %s64 = int_to_ptr.vmem [resolvable:$true] %s63
      %69 = dma.hbm_to_vmem [thread:$0]  %s62, 2048, %s64, [#allocation9], 128, 128, 8
    $region17: #{tpu_custom_call.1} parent=1 // pred_fallthru
      _
    // Predicated region
    $region18: #{tpu_custom_call.1} parent=1 // pred_check
      _
    $region19: #{tpu_custom_call.1} parent=1 // pred_check_branch
      %71 = sbr.rel (0) target = $region21
    $region20: #{tpu_custom_call.1} parent=1 // pred_region
      %73 = vsyncadd [#allocation9], 0
      %s74 = sshll.u32 %s4, 4
      %s75 = int_to_ptr.hbm [resolvable:$true] %s74
      %s76 = sshll.u32 [#allocation10], 4
      %s77 = int_to_ptr.vmem [resolvable:$true] %s76
      %82 = dma.hbm_to_vmem [thread:$0]  %s75, 128, %s77, [#allocation9], 16, 16, 1
    $region21: #{tpu_custom_call.1} parent=1 // pred_fallthru
      _
    // Predicated region
    $region22: #{tpu_custom_call.1} parent=1 // pred_check
      _
    $region23: #{tpu_custom_call.1} parent=1 // pred_check_branch
      %84 = sbr.rel (0) target = $region25
    $region24: #{tpu_custom_call.1} parent=1 // pred_region
      %86 = vsyncadd [#allocation12], 0
      %s87 = sshll.u32 %s5, 4
      %s88 = int_to_ptr.hbm [resolvable:$true] %s87
      %s89 = sshll.u32 [#allocation11], 4
      %s90 = int_to_ptr.vmem [resolvable:$true] %s89
      %95 = dma.hbm_to_vmem [thread:$0]  %s88, 128, %s90, [#allocation12], 16, 16, 1
    $region25: #{tpu_custom_call.1} parent=1 // pred_fallthru
      _
    // Predicated region
    $region26: #{tpu_custom_call.1} parent=1 // pred_check
      _
    $region27: #{tpu_custom_call.1} parent=1 // pred_check_branch
      %97 = sbr.rel (0) target = $region29
    $region28: #{tpu_custom_call.1} parent=1 // pred_region
      %99 = vsyncadd [#allocation12], 0
      %s100 = sshll.u32 %s6, 4
      %s101 = int_to_ptr.hbm [resolvable:$true] %s100
      %s102 = sshll.u32 [#allocation13], 4
      %s103 = int_to_ptr.vmem [resolvable:$true] %s102
      %108 = dma.hbm_to_vmem [thread:$0]  %s101, 128, %s103, [#allocation12], 16, 16, 1
    $region29: #{tpu_custom_call.1} parent=1 // pred_fallthru
      _
    // Predicated region
    $region30: #{tpu_custom_call.1} parent=1 // pred_check
      _
    $region31: #{tpu_custom_call.1} parent=1 // pred_check_branch
      %110 = sbr.rel (0) target = $region33
    $region32: #{tpu_custom_call.1} parent=1 // pred_region
      _
    $region33: #{tpu_custom_call.1} parent=1 // pred_fallthru
      _
    // Predicated region
    $region34: #{tpu_custom_call.1} parent=1 // pred_check
      _
    $region35: #{tpu_custom_call.1} parent=1 // pred_check_branch
      %112 = sbr.rel (0) target = $region37
    $region36: #{tpu_custom_call.1} parent=1 // pred_region
      %114 = vsyncadd [#allocation15], 0
      %s115 = sshll.u32 %s8, 4
      %s116 = int_to_ptr.hbm [resolvable:$true] %s115
      %s117 = sshll.u32 [#allocation14], 4
      %s118 = int_to_ptr.vmem [resolvable:$true] %s117
      %123 = dma.hbm_to_vmem [thread:$0]  %s116, 2048, %s118, [#allocation15], 128, 128, 8
    $region37: #{tpu_custom_call.1} parent=1 // pred_fallthru
      _
    // Predicated region
    $region38: #{tpu_custom_call.1} parent=1 // pred_check
      _
    $region39: #{tpu_custom_call.1} parent=1 // pred_check_branch
      %125 = sbr.rel (0) target = $region41
    $region40: #{tpu_custom_call.1} parent=1 // pred_region
      %127 = dma.done [#allocation3], 128
    $region41: #{tpu_custom_call.1} parent=1 // pred_fallthru
      _
    // Predicated region
    $region42: #{tpu_custom_call.1} parent=1 // pred_check
      _
    $region43: #{tpu_custom_call.1} parent=1 // pred_check_branch
      %129 = sbr.rel (0) target = $region45
    $region44: #{tpu_custom_call.1} parent=1 // pred_region
      %131 = dma.done [#allocation6], 2048
    $region45: #{tpu_custom_call.1} parent=1 // pred_fallthru
      _
    // Predicated region
    $region46: #{tpu_custom_call.1} parent=1 // pred_check
      _
    $region47: #{tpu_custom_call.1} parent=1 // pred_check_branch
      %133 = sbr.rel (0) target = $region49
    $region48: #{tpu_custom_call.1} parent=1 // pred_region
      %135 = dma.done [#allocation6], 14336
    $region49: #{tpu_custom_call.1} parent=1 // pred_fallthru
      _
    // Predicated region
    $region50: #{tpu_custom_call.1} parent=1 // pred_check
      _
    $region51: #{tpu_custom_call.1} parent=1 // pred_check_branch
      %137 = sbr.rel (0) target = $region53
    $region52: #{tpu_custom_call.1} parent=1 // pred_region
      %139 = dma.done [#allocation9], 2048
    $region53: #{tpu_custom_call.1} parent=1 // pred_fallthru
      _
    // Predicated region
    $region54: #{tpu_custom_call.1} parent=1 // pred_check
      _
    $region55: #{tpu_custom_call.1} parent=1 // pred_check_branch
      %141 = sbr.rel (0) target = $region57
    $region56: #{tpu_custom_call.1} parent=1 // pred_region
      %143 = dma.done [#allocation9], 128
    $region57: #{tpu_custom_call.1} parent=1 // pred_fallthru
      _
    // Predicated region
    $region58: #{tpu_custom_call.1} parent=1 // pred_check
      _
    $region59: #{tpu_custom_call.1} parent=1 // pred_check_branch
      %145 = sbr.rel (0) target = $region61
    $region60: #{tpu_custom_call.1} parent=1 // pred_region
      %147 = dma.done [#allocation12], 128
    $region61: #{tpu_custom_call.1} parent=1 // pred_fallthru
      _
    // Predicated region
    $region62: #{tpu_custom_call.1} parent=1 // pred_check
      _
    $region63: #{tpu_custom_call.1} parent=1 // pred_check_branch
      %149 = sbr.rel (0) target = $region65
    $region64: #{tpu_custom_call.1} parent=1 // pred_region
      %151 = dma.done [#allocation12], 128
    $region65: #{tpu_custom_call.1} parent=1 // pred_fallthru
      _
    // Predicated region
    $region66: #{tpu_custom_call.1} parent=1 // pred_check
      _
    $region67: #{tpu_custom_call.1} parent=1 // pred_check_branch
      %153 = sbr.rel (0) target = $region69
    $region68: #{tpu_custom_call.1} parent=1 // pred_region
      %155 = dma.done [#allocation15], 2048
    $region69: #{tpu_custom_call.1} parent=1 // pred_fallthru
      _
    %v156 = vld [vmem:[#allocation2] sm:$0xff]
    %v157 = vld [vmem:[#allocation5] sm:$0xff]
    %v158 = vld [vmem:[#allocation5 + $0x8] sm:$0xff]
    %v159 = vld [vmem:[#allocation5 + $0x10] sm:$0xff]
    %v160 = vld [vmem:[#allocation5 + $0x18] sm:$0xff]
    %v161 = vld [vmem:[#allocation5 + $0x20] sm:$0xff]
    %v162 = vld [vmem:[#allocation5 + $0x28] sm:$0xff]
    %v163 = vld [vmem:[#allocation5 + $0x30] sm:$0xff]
    %v164 = vld [vmem:[#allocation5 + $0x38] sm:$0xff]
    %v165 = vld [vmem:[#allocation5 + $0x40] sm:$0xff]
    %v166 = vld [vmem:[#allocation5 + $0x48] sm:$0xff]
    %v167 = vld [vmem:[#allocation5 + $0x50] sm:$0xff]
    %v168 = vld [vmem:[#allocation5 + $0x58] sm:$0xff]
    %v169 = vld [vmem:[#allocation5 + $0x60] sm:$0xff]
    %v170 = vld [vmem:[#allocation5 + $0x68] sm:$0xff]
    %v171 = vld [vmem:[#allocation5 + $0x70] sm:$0xff]
    %v172 = vld [vmem:[#allocation5 + $0x78] sm:$0xff]
    %v173 = vld [vmem:[#allocation10] sm:$0x1]
    %v175 = vperm.slane %v173, 0
    %v177 = vand.u32 %v172, 4294901760
    %178 = vmatpush.msra.mxu0 %v177
    %v179 = vand.u32 %v171, 4294901760
    %180 = vmatpush.msra.mxu0 %v179
    %v181 = vand.u32 %v170, 4294901760
    %182 = vmatpush.msra.mxu0 %v181
    %v183 = vand.u32 %v169, 4294901760
    %184 = vmatpush.msra.mxu0 %v183
    %v185 = vand.u32 %v168, 4294901760
    %186 = vmatpush.msra.mxu0 %v185
    %v187 = vand.u32 %v167, 4294901760
    %188 = vmatpush.msra.mxu0 %v187
    %v189 = vand.u32 %v166, 4294901760
    %190 = vmatpush.msra.mxu0 %v189
    %v191 = vand.u32 %v165, 4294901760
    %192 = vmatpush.msra.mxu0 %v191
    %v193 = vand.u32 %v164, 4294901760
    %194 = vmatpush.msra.mxu0 %v193
    %v195 = vand.u32 %v163, 4294901760
    %196 = vmatpush.msra.mxu0 %v195
    %v197 = vand.u32 %v162, 4294901760
    %198 = vmatpush.msra.mxu0 %v197
    %v199 = vand.u32 %v161, 4294901760
    %200 = vmatpush.msra.mxu0 %v199
    %v201 = vand.u32 %v160, 4294901760
    %202 = vmatpush.msra.mxu0 %v201
    %v203 = vand.u32 %v159, 4294901760
    %204 = vmatpush.msra.mxu0 %v203
    %v205 = vand.u32 %v158, 4294901760
    %206 = vmatpush.msra.mxu0 %v205
    %v207 = vand.u32 %v157, 4294901760
    %208 = vmatpush.msra.mxu0 %v207
    %v209 = vand.u32 %v156, 4294901760
    %v210 = vsub.f32 %v156, %v209
    %v211 = vand.u32 %v210, 4294901760
    %v212 = vsub.f32 %v210, %v211
    %v213 = vand.u32 %v212, 4294901760
    %214 = vmatmul.f32.gmra.mxu0 %v213
    %v215 = vpop.f32.mrf.mxu0
    %v216 = vadd.f32 %v175, %v215
    %217 = vdwg.mxu0
    %v218 = vand.u32 %v172, 4294901760
    %v219 = vsub.f32 %v172, %v218
    %v220 = vand.u32 %v219, 4294901760
    %v221 = vsub.f32 %v219, %v220
    %v222 = vand.u32 %v221, 4294901760
    %223 = vmatpush.msra.mxu0 %v222
    %v224 = vand.u32 %v171, 4294901760
    %v225 = vsub.f32 %v171, %v224
    %v226 = vand.u32 %v225, 4294901760
    %v227 = vsub.f32 %v225, %v226
    %v228 = vand.u32 %v227, 4294901760
    %229 = vmatpush.msra.mxu0 %v228
    %v230 = vand.u32 %v170, 4294901760
    %v231 = vsub.f32 %v170, %v230
    %v232 = vand.u32 %v231, 4294901760
    %v233 = vsub.f32 %v231, %v232
    %v234 = vand.u32 %v233, 4294901760
    %235 = vmatpush.msra.mxu0 %v234
    %v236 = vand.u32 %v169, 4294901760
    %v237 = vsub.f32 %v169, %v236
    %v238 = vand.u32 %v237, 4294901760
    %v239 = vsub.f32 %v237, %v238
    %v240 = vand.u32 %v239, 4294901760
    %241 = vmatpush.msra.mxu0 %v240
    %v242 = vand.u32 %v168, 4294901760
    %v243 = vsub.f32 %v168, %v242
    %v244 = vand.u32 %v243, 4294901760
    %v245 = vsub.f32 %v243, %v244
    %v246 = vand.u32 %v245, 4294901760
    %247 = vmatpush.msra.mxu0 %v246
    %v248 = vand.u32 %v167, 4294901760
    %v249 = vsub.f32 %v167, %v248
    %v250 = vand.u32 %v249, 4294901760
    %v251 = vsub.f32 %v249, %v250
    %v252 = vand.u32 %v251, 4294901760
    %253 = vmatpush.msra.mxu0 %v252
    %v254 = vand.u32 %v166, 4294901760
    %v255 = vsub.f32 %v166, %v254
    %v256 = vand.u32 %v255, 4294901760
    %v257 = vsub.f32 %v255, %v256
    %v258 = vand.u32 %v257, 4294901760
    %259 = vmatpush.msra.mxu0 %v258
    %v260 = vand.u32 %v165, 4294901760
    %v261 = vsub.f32 %v165, %v260
    %v262 = vand.u32 %v261, 4294901760
    %v263 = vsub.f32 %v261, %v262
    %v264 = vand.u32 %v263, 4294901760
    %265 = vmatpush.msra.mxu0 %v264
    %v266 = vand.u32 %v164, 4294901760
    %v267 = vsub.f32 %v164, %v266
    %v268 = vand.u32 %v267, 4294901760
    %v269 = vsub.f32 %v267, %v268
    %v270 = vand.u32 %v269, 4294901760
    %271 = vmatpush.msra.mxu0 %v270
    %v272 = vand.u32 %v163, 4294901760
    %v273 = vsub.f32 %v163, %v272
    %v274 = vand.u32 %v273, 4294901760
    %v275 = vsub.f32 %v273, %v274
    %v276 = vand.u32 %v275, 4294901760
    %277 = vmatpush.msra.mxu0 %v276
    %v278 = vand.u32 %v162, 4294901760
    %v279 = vsub.f32 %v162, %v278
    %v280 = vand.u32 %v279, 4294901760
    %v281 = vsub.f32 %v279, %v280
    %v282 = vand.u32 %v281, 4294901760
    %283 = vmatpush.msra.mxu0 %v282
    %v284 = vand.u32 %v161, 4294901760
    %v285 = vsub.f32 %v161, %v284
    %v286 = vand.u32 %v285, 4294901760
    %v287 = vsub.f32 %v285, %v286
    %v288 = vand.u32 %v287, 4294901760
    %289 = vmatpush.msra.mxu0 %v288
    %v290 = vand.u32 %v160, 4294901760
    %v291 = vsub.f32 %v160, %v290
    %v292 = vand.u32 %v291, 4294901760
    %v293 = vsub.f32 %v291, %v292
    %v294 = vand.u32 %v293, 4294901760
    %295 = vmatpush.msra.mxu0 %v294
    %v296 = vand.u32 %v159, 4294901760
    %v297 = vsub.f32 %v159, %v296
    %v298 = vand.u32 %v297, 4294901760
    %v299 = vsub.f32 %v297, %v298
    %v300 = vand.u32 %v299, 4294901760
    %301 = vmatpush.msra.mxu0 %v300
    %v302 = vand.u32 %v158, 4294901760
    %v303 = vsub.f32 %v158, %v302
    %v304 = vand.u32 %v303, 4294901760
    %v305 = vsub.f32 %v303, %v304
    %v306 = vand.u32 %v305, 4294901760
    %307 = vmatpush.msra.mxu0 %v306
    %v308 = vand.u32 %v157, 4294901760
    %v309 = vsub.f32 %v157, %v308
    %v310 = vand.u32 %v309, 4294901760
    %v311 = vsub.f32 %v309, %v310
    %v312 = vand.u32 %v311, 4294901760
    %313 = vmatpush.msra.mxu0 %v312
    %v314 = vand.u32 %v156, 4294901760
    %315 = vmatmul.f32.gmra.mxu0 %v314
    %v316 = vpop.f32.mrf.mxu0
    %v317 = vadd.f32 %v216, %v316
    %318 = vdwg.mxu0
    %v319 = vand.u32 %v172, 4294901760
    %v320 = vsub.f32 %v172, %v319
    %321 = vmatpush.msra.mxu0 %v320
    %v322 = vand.u32 %v171, 4294901760
    %v323 = vsub.f32 %v171, %v322
    %324 = vmatpush.msra.mxu0 %v323
    %v325 = vand.u32 %v170, 4294901760
    %v326 = vsub.f32 %v170, %v325
    %327 = vmatpush.msra.mxu0 %v326
    %v328 = vand.u32 %v169, 4294901760
    %v329 = vsub.f32 %v169, %v328
    %330 = vmatpush.msra.mxu0 %v329
    %v331 = vand.u32 %v168, 4294901760
    %v332 = vsub.f32 %v168, %v331
    %333 = vmatpush.msra.mxu0 %v332
    %v334 = vand.u32 %v167, 4294901760
    %v335 = vsub.f32 %v167, %v334
    %336 = vmatpush.msra.mxu0 %v335
    %v337 = vand.u32 %v166, 4294901760
    %v338 = vsub.f32 %v166, %v337
    %339 = vmatpush.msra.mxu0 %v338
    %v340 = vand.u32 %v165, 4294901760
    %v341 = vsub.f32 %v165, %v340
    %342 = vmatpush.msra.mxu0 %v341
    %v343 = vand.u32 %v164, 4294901760
    %v344 = vsub.f32 %v164, %v343
    %345 = vmatpush.msra.mxu0 %v344
    %v346 = vand.u32 %v163, 4294901760
    %v347 = vsub.f32 %v163, %v346
    %348 = vmatpush.msra.mxu0 %v347
    %v349 = vand.u32 %v162, 4294901760
    %v350 = vsub.f32 %v162, %v349
    %351 = vmatpush.msra.mxu0 %v350
    %v352 = vand.u32 %v161, 4294901760
    %v353 = vsub.f32 %v161, %v352
    %354 = vmatpush.msra.mxu0 %v353
    %v355 = vand.u32 %v160, 4294901760
    %v356 = vsub.f32 %v160, %v355
    %357 = vmatpush.msra.mxu0 %v356
    %v358 = vand.u32 %v159, 4294901760
    %v359 = vsub.f32 %v159, %v358
    %360 = vmatpush.msra.mxu0 %v359
    %v361 = vand.u32 %v158, 4294901760
    %v362 = vsub.f32 %v158, %v361
    %363 = vmatpush.msra.mxu0 %v362
    %v364 = vand.u32 %v157, 4294901760
    %v365 = vsub.f32 %v157, %v364
    %366 = vmatpush.msra.mxu0 %v365
    %v367 = vand.u32 %v156, 4294901760
    %v368 = vsub.f32 %v156, %v367
    %369 = vmatmul.f32.gmra.mxu0 %v368
    %v370 = vpop.f32.mrf.mxu0
    %v371 = vadd.f32 %v317, %v370
    %372 = vdwg.mxu0
    %v373 = vand.u32 %v172, 4294901760
    %374 = vmatpush.msra.mxu0 %v373
    %v375 = vand.u32 %v171, 4294901760
    %376 = vmatpush.msra.mxu0 %v375
    %v377 = vand.u32 %v170, 4294901760
    %378 = vmatpush.msra.mxu0 %v377
    %v379 = vand.u32 %v169, 4294901760
    %380 = vmatpush.msra.mxu0 %v379
    %v381 = vand.u32 %v168, 4294901760
    %382 = vmatpush.msra.mxu0 %v381
    %v383 = vand.u32 %v167, 4294901760
    %384 = vmatpush.msra.mxu0 %v383
    %v385 = vand.u32 %v166, 4294901760
    %386 = vmatpush.msra.mxu0 %v385
    %v387 = vand.u32 %v165, 4294901760
    %388 = vmatpush.msra.mxu0 %v387
    %v389 = vand.u32 %v164, 4294901760
    %390 = vmatpush.msra.mxu0 %v389
    %v391 = vand.u32 %v163, 4294901760
    %392 = vmatpush.msra.mxu0 %v391
    %v393 = vand.u32 %v162, 4294901760
    %394 = vmatpush.msra.mxu0 %v393
    %v395 = vand.u32 %v161, 4294901760
    %396 = vmatpush.msra.mxu0 %v395
    %v397 = vand.u32 %v160, 4294901760
    %398 = vmatpush.msra.mxu0 %v397
    %v399 = vand.u32 %v159, 4294901760
    %400 = vmatpush.msra.mxu0 %v399
    %v401 = vand.u32 %v158, 4294901760
    %402 = vmatpush.msra.mxu0 %v401
    %v403 = vand.u32 %v157, 4294901760
    %404 = vmatpush.msra.mxu0 %v403
    %v405 = vand.u32 %v156, 4294901760
    %v406 = vsub.f32 %v156, %v405
    %v407 = vand.u32 %v406, 4294901760
    %408 = vmatmul.f32.gmra.mxu0 %v407
    %v409 = vpop.f32.mrf.mxu0
    %v410 = vadd.f32 %v371, %v409
    %411 = vdwg.mxu0
    %v412 = vand.u32 %v172, 4294901760
    %v413 = vsub.f32 %v172, %v412
    %v414 = vand.u32 %v413, 4294901760
    %415 = vmatpush.msra.mxu0 %v414
    %v416 = vand.u32 %v171, 4294901760
    %v417 = vsub.f32 %v171, %v416
    %v418 = vand.u32 %v417, 4294901760
    %419 = vmatpush.msra.mxu0 %v418
    %v420 = vand.u32 %v170, 4294901760
    %v421 = vsub.f32 %v170, %v420
    %v422 = vand.u32 %v421, 4294901760
    %423 = vmatpush.msra.mxu0 %v422
    %v424 = vand.u32 %v169, 4294901760
    %v425 = vsub.f32 %v169, %v424
    %v426 = vand.u32 %v425, 4294901760
    %427 = vmatpush.msra.mxu0 %v426
    %v428 = vand.u32 %v168, 4294901760
    %v429 = vsub.f32 %v168, %v428
    %v430 = vand.u32 %v429, 4294901760
    %431 = vmatpush.msra.mxu0 %v430
    %v432 = vand.u32 %v167, 4294901760
    %v433 = vsub.f32 %v167, %v432
    %v434 = vand.u32 %v433, 4294901760
    %435 = vmatpush.msra.mxu0 %v434
    %v436 = vand.u32 %v166, 4294901760
    %v437 = vsub.f32 %v166, %v436
    %v438 = vand.u32 %v437, 4294901760
    %439 = vmatpush.msra.mxu0 %v438
    %v440 = vand.u32 %v165, 4294901760
    %v441 = vsub.f32 %v165, %v440
    %v442 = vand.u32 %v441, 4294901760
    %443 = vmatpush.msra.mxu0 %v442
    %v444 = vand.u32 %v164, 4294901760
    %v445 = vsub.f32 %v164, %v444
    %v446 = vand.u32 %v445, 4294901760
    %447 = vmatpush.msra.mxu0 %v446
    %v448 = vand.u32 %v163, 4294901760
    %v449 = vsub.f32 %v163, %v448
    %v450 = vand.u32 %v449, 4294901760
    %451 = vmatpush.msra.mxu0 %v450
    %v452 = vand.u32 %v162, 4294901760
    %v453 = vsub.f32 %v162, %v452
    %v454 = vand.u32 %v453, 4294901760
    %455 = vmatpush.msra.mxu0 %v454
    %v456 = vand.u32 %v161, 4294901760
    %v457 = vsub.f32 %v161, %v456
    %v458 = vand.u32 %v457, 4294901760
    %459 = vmatpush.msra.mxu0 %v458
    %v460 = vand.u32 %v160, 4294901760
    %v461 = vsub.f32 %v160, %v460
    %v462 = vand.u32 %v461, 4294901760
    %463 = vmatpush.msra.mxu0 %v462
    %v464 = vand.u32 %v159, 4294901760
    %v465 = vsub.f32 %v159, %v464
    %v466 = vand.u32 %v465, 4294901760
    %467 = vmatpush.msra.mxu0 %v466
    %v468 = vand.u32 %v158, 4294901760
    %v469 = vsub.f32 %v158, %v468
    %v470 = vand.u32 %v469, 4294901760
    %471 = vmatpush.msra.mxu0 %v470
    %v472 = vand.u32 %v157, 4294901760
    %v473 = vsub.f32 %v157, %v472
    %v474 = vand.u32 %v473, 4294901760
    %475 = vmatpush.msra.mxu0 %v474
    %v476 = vand.u32 %v156, 4294901760
    %477 = vmatmul.f32.gmra.mxu0 %v476
    %v478 = vpop.f32.mrf.mxu0
    %v479 = vadd.f32 %v410, %v478
    %480 = vdwg.mxu0
    %v481 = vand.u32 %v172, 4294901760
    %482 = vmatpush.msra.mxu0 %v481
    %v483 = vand.u32 %v171, 4294901760
    %484 = vmatpush.msra.mxu0 %v483
    %v485 = vand.u32 %v170, 4294901760
    %486 = vmatpush.msra.mxu0 %v485
    %v487 = vand.u32 %v169, 4294901760
    %488 = vmatpush.msra.mxu0 %v487
    %v489 = vand.u32 %v168, 4294901760
    %490 = vmatpush.msra.mxu0 %v489
    %v491 = vand.u32 %v167, 4294901760
    %492 = vmatpush.msra.mxu0 %v491
    %v493 = vand.u32 %v166, 4294901760
    %494 = vmatpush.msra.mxu0 %v493
    %v495 = vand.u32 %v165, 4294901760
    %496 = vmatpush.msra.mxu0 %v495
    %v497 = vand.u32 %v164, 4294901760
    %498 = vmatpush.msra.mxu0 %v497
    %v499 = vand.u32 %v163, 4294901760
    %500 = vmatpush.msra.mxu0 %v499
    %v501 = vand.u32 %v162, 4294901760
    %502 = vmatpush.msra.mxu0 %v501
    %v503 = vand.u32 %v161, 4294901760
    %504 = vmatpush.msra.mxu0 %v503
    %v505 = vand.u32 %v160, 4294901760
    %506 = vmatpush.msra.mxu0 %v505
    %v507 = vand.u32 %v159, 4294901760
    %508 = vmatpush.msra.mxu0 %v507
    %v509 = vand.u32 %v158, 4294901760
    %510 = vmatpush.msra.mxu0 %v509
    %v511 = vand.u32 %v157, 4294901760
    %512 = vmatpush.msra.mxu0 %v511
    %v513 = vand.u32 %v156, 4294901760
    %514 = vmatmul.f32.gmra.mxu0 %v513
    %v515 = vpop.f32.mrf.mxu0
    %v516 = vadd.f32 %v479, %v515
    %517 = vdwg.mxu0
    %v518 = vld [vmem:[#allocation14] sm:$0xff]
    %v519 = vld [vmem:[#allocation14 + $0x8] sm:$0xff]
    %v520 = vld [vmem:[#allocation14 + $0x10] sm:$0xff]
    %v521 = vld [vmem:[#allocation14 + $0x18] sm:$0xff]
    %v522 = vld [vmem:[#allocation14 + $0x20] sm:$0xff]
    %v523 = vld [vmem:[#allocation14 + $0x28] sm:$0xff]
    %v524 = vld [vmem:[#allocation14 + $0x30] sm:$0xff]
    %v525 = vld [vmem:[#allocation14 + $0x38] sm:$0xff]
    %v526 = vld [vmem:[#allocation14 + $0x40] sm:$0xff]
    %v527 = vld [vmem:[#allocation14 + $0x48] sm:$0xff]
    %v528 = vld [vmem:[#allocation14 + $0x50] sm:$0xff]
    %v529 = vld [vmem:[#allocation14 + $0x58] sm:$0xff]
    %v530 = vld [vmem:[#allocation14 + $0x60] sm:$0xff]
    %v531 = vld [vmem:[#allocation14 + $0x68] sm:$0xff]
    %v532 = vld [vmem:[#allocation14 + $0x70] sm:$0xff]
    %v533 = vld [vmem:[#allocation14 + $0x78] sm:$0xff]
    %v534 = vand.u32 %v533, 4294901760
    %535 = vmatpush.msra.mxu0 %v534
    %v536 = vand.u32 %v532, 4294901760
    %537 = vmatpush.msra.mxu0 %v536
    %v538 = vand.u32 %v531, 4294901760
    %539 = vmatpush.msra.mxu0 %v538
    %v540 = vand.u32 %v530, 4294901760
    %541 = vmatpush.msra.mxu0 %v540
    %v542 = vand.u32 %v529, 4294901760
    %543 = vmatpush.msra.mxu0 %v542
    %v544 = vand.u32 %v528, 4294901760
    %545 = vmatpush.msra.mxu0 %v544
    %v546 = vand.u32 %v527, 4294901760
    %547 = vmatpush.msra.mxu0 %v546
    %v548 = vand.u32 %v526, 4294901760
    %549 = vmatpush.msra.mxu0 %v548
    %v550 = vand.u32 %v525, 4294901760
    %551 = vmatpush.msra.mxu0 %v550
    %v552 = vand.u32 %v524, 4294901760
    %553 = vmatpush.msra.mxu0 %v552
    %v554 = vand.u32 %v523, 4294901760
    %555 = vmatpush.msra.mxu0 %v554
    %v556 = vand.u32 %v522, 4294901760
    %557 = vmatpush.msra.mxu0 %v556
    %v558 = vand.u32 %v521, 4294901760
    %559 = vmatpush.msra.mxu0 %v558
    %v560 = vand.u32 %v520, 4294901760
    %561 = vmatpush.msra.mxu0 %v560
    %v562 = vand.u32 %v519, 4294901760
    %563 = vmatpush.msra.mxu0 %v562
    %v564 = vand.u32 %v518, 4294901760
    %565 = vmatpush.msra.mxu0 %v564
    %v566 = vand.u32 %v516, 4294901760
    %v567 = vsub.f32 %v516, %v566
    %v568 = vand.u32 %v567, 4294901760
    %v569 = vsub.f32 %v567, %v568
    %v570 = vand.u32 %v569, 4294901760
    %571 = vmatmul.f32.gmra.mxu0 %v570
    %v572 = vpop.f32.mrf.mxu0
    %v573 = vadd.f32 0.0, %v572
    %574 = vdwg.mxu0
    %v575 = vand.u32 %v533, 4294901760
    %v576 = vsub.f32 %v533, %v575
    %v577 = vand.u32 %v576, 4294901760
    %v578 = vsub.f32 %v576, %v577
    %v579 = vand.u32 %v578, 4294901760
    %580 = vmatpush.msra.mxu0 %v579
    %v581 = vand.u32 %v532, 4294901760
    %v582 = vsub.f32 %v532, %v581
    %v583 = vand.u32 %v582, 4294901760
    %v584 = vsub.f32 %v582, %v583
    %v585 = vand.u32 %v584, 4294901760
    %586 = vmatpush.msra.mxu0 %v585
    %v587 = vand.u32 %v531, 4294901760
    %v588 = vsub.f32 %v531, %v587
    %v589 = vand.u32 %v588, 4294901760
    %v590 = vsub.f32 %v588, %v589
    %v591 = vand.u32 %v590, 4294901760
    %592 = vmatpush.msra.mxu0 %v591
    %v593 = vand.u32 %v530, 4294901760
    %v594 = vsub.f32 %v530, %v593
    %v595 = vand.u32 %v594, 4294901760
    %v596 = vsub.f32 %v594, %v595
    %v597 = vand.u32 %v596, 4294901760
    %598 = vmatpush.msra.mxu0 %v597
    %v599 = vand.u32 %v529, 4294901760
    %v600 = vsub.f32 %v529, %v599
    %v601 = vand.u32 %v600, 4294901760
    %v602 = vsub.f32 %v600, %v601
    %v603 = vand.u32 %v602, 4294901760
    %604 = vmatpush.msra.mxu0 %v603
    %v605 = vand.u32 %v528, 4294901760
    %v606 = vsub.f32 %v528, %v605
    %v607 = vand.u32 %v606, 4294901760
    %v608 = vsub.f32 %v606, %v607
    %v609 = vand.u32 %v608, 4294901760
    %610 = vmatpush.msra.mxu0 %v609
    %v611 = vand.u32 %v527, 4294901760
    %v612 = vsub.f32 %v527, %v611
    %v613 = vand.u32 %v612, 4294901760
    %v614 = vsub.f32 %v612, %v613
    %v615 = vand.u32 %v614, 4294901760
    %616 = vmatpush.msra.mxu0 %v615
    %v617 = vand.u32 %v526, 4294901760
    %v618 = vsub.f32 %v526, %v617
    %v619 = vand.u32 %v618, 4294901760
    %v620 = vsub.f32 %v618, %v619
    %v621 = vand.u32 %v620, 4294901760
    %622 = vmatpush.msra.mxu0 %v621
    %v623 = vand.u32 %v525, 4294901760
    %v624 = vsub.f32 %v525, %v623
    %v625 = vand.u32 %v624, 4294901760
    %v626 = vsub.f32 %v624, %v625
    %v627 = vand.u32 %v626, 4294901760
    %628 = vmatpush.msra.mxu0 %v627
    %v629 = vand.u32 %v524, 4294901760
    %v630 = vsub.f32 %v524, %v629
    %v631 = vand.u32 %v630, 4294901760
    %v632 = vsub.f32 %v630, %v631
    %v633 = vand.u32 %v632, 4294901760
    %634 = vmatpush.msra.mxu0 %v633
    %v635 = vand.u32 %v523, 4294901760
    %v636 = vsub.f32 %v523, %v635
    %v637 = vand.u32 %v636, 4294901760
    %v638 = vsub.f32 %v636, %v637
    %v639 = vand.u32 %v638, 4294901760
    %640 = vmatpush.msra.mxu0 %v639
    %v641 = vand.u32 %v522, 4294901760
    %v642 = vsub.f32 %v522, %v641
    %v643 = vand.u32 %v642, 4294901760
    %v644 = vsub.f32 %v642, %v643
    %v645 = vand.u32 %v644, 4294901760
    %646 = vmatpush.msra.mxu0 %v645
    %v647 = vand.u32 %v521, 4294901760
    %v648 = vsub.f32 %v521, %v647
    %v649 = vand.u32 %v648, 4294901760
    %v650 = vsub.f32 %v648, %v649
    %v651 = vand.u32 %v650, 4294901760
    %652 = vmatpush.msra.mxu0 %v651
    %v653 = vand.u32 %v520, 4294901760
    %v654 = vsub.f32 %v520, %v653
    %v655 = vand.u32 %v654, 4294901760
    %v656 = vsub.f32 %v654, %v655
    %v657 = vand.u32 %v656, 4294901760
    %658 = vmatpush.msra.mxu0 %v657
    %v659 = vand.u32 %v519, 4294901760
    %v660 = vsub.f32 %v519, %v659
    %v661 = vand.u32 %v660, 4294901760
    %v662 = vsub.f32 %v660, %v661
    %v663 = vand.u32 %v662, 4294901760
    %664 = vmatpush.msra.mxu0 %v663
    %v665 = vand.u32 %v518, 4294901760
    %v666 = vsub.f32 %v518, %v665
    %v667 = vand.u32 %v666, 4294901760
    %v668 = vsub.f32 %v666, %v667
    %v669 = vand.u32 %v668, 4294901760
    %670 = vmatpush.msra.mxu0 %v669
    %v671 = vand.u32 %v516, 4294901760
    %672 = vmatmul.f32.gmra.mxu0 %v671
    %v673 = vpop.f32.mrf.mxu0
    %v674 = vadd.f32 %v573, %v673
    %675 = vdwg.mxu0
    %v676 = vand.u32 %v533, 4294901760
    %v677 = vsub.f32 %v533, %v676
    %678 = vmatpush.msra.mxu0 %v677
    %v679 = vand.u32 %v532, 4294901760
    %v680 = vsub.f32 %v532, %v679
    %681 = vmatpush.msra.mxu0 %v680
    %v682 = vand.u32 %v531, 4294901760
    %v683 = vsub.f32 %v531, %v682
    %684 = vmatpush.msra.mxu0 %v683
    %v685 = vand.u32 %v530, 4294901760
    %v686 = vsub.f32 %v530, %v685
    %687 = vmatpush.msra.mxu0 %v686
    %v688 = vand.u32 %v529, 4294901760
    %v689 = vsub.f32 %v529, %v688
    %690 = vmatpush.msra.mxu0 %v689
    %v691 = vand.u32 %v528, 4294901760
    %v692 = vsub.f32 %v528, %v691
    %693 = vmatpush.msra.mxu0 %v692
    %v694 = vand.u32 %v527, 4294901760
    %v695 = vsub.f32 %v527, %v694
    %696 = vmatpush.msra.mxu0 %v695
    %v697 = vand.u32 %v526, 4294901760
    %v698 = vsub.f32 %v526, %v697
    %699 = vmatpush.msra.mxu0 %v698
    %v700 = vand.u32 %v525, 4294901760
    %v701 = vsub.f32 %v525, %v700
    %702 = vmatpush.msra.mxu0 %v701
    %v703 = vand.u32 %v524, 4294901760
    %v704 = vsub.f32 %v524, %v703
    %705 = vmatpush.msra.mxu0 %v704
    %v706 = vand.u32 %v523, 4294901760
    %v707 = vsub.f32 %v523, %v706
    %708 = vmatpush.msra.mxu0 %v707
    %v709 = vand.u32 %v522, 4294901760
    %v710 = vsub.f32 %v522, %v709
    %711 = vmatpush.msra.mxu0 %v710
    %v712 = vand.u32 %v521, 4294901760
    %v713 = vsub.f32 %v521, %v712
    %714 = vmatpush.msra.mxu0 %v713
    %v715 = vand.u32 %v520, 4294901760
    %v716 = vsub.f32 %v520, %v715
    %717 = vmatpush.msra.mxu0 %v716
    %v718 = vand.u32 %v519, 4294901760
    %v719 = vsub.f32 %v519, %v718
    %720 = vmatpush.msra.mxu0 %v719
    %v721 = vand.u32 %v518, 4294901760
    %v722 = vsub.f32 %v518, %v721
    %723 = vmatpush.msra.mxu0 %v722
    %v724 = vand.u32 %v516, 4294901760
    %v725 = vsub.f32 %v516, %v724
    %726 = vmatmul.f32.gmra.mxu0 %v725
    %v727 = vpop.f32.mrf.mxu0
    %v728 = vadd.f32 %v674, %v727
    %729 = vdwg.mxu0
    %v730 = vand.u32 %v533, 4294901760
    %731 = vmatpush.msra.mxu0 %v730
    %v732 = vand.u32 %v532, 4294901760
    %733 = vmatpush.msra.mxu0 %v732
    %v734 = vand.u32 %v531, 4294901760
    %735 = vmatpush.msra.mxu0 %v734
    %v736 = vand.u32 %v530, 4294901760
    %737 = vmatpush.msra.mxu0 %v736
    %v738 = vand.u32 %v529, 4294901760
    %739 = vmatpush.msra.mxu0 %v738
    %v740 = vand.u32 %v528, 4294901760
    %741 = vmatpush.msra.mxu0 %v740
    %v742 = vand.u32 %v527, 4294901760
    %743 = vmatpush.msra.mxu0 %v742
    %v744 = vand.u32 %v526, 4294901760
    %745 = vmatpush.msra.mxu0 %v744
    %v746 = vand.u32 %v525, 4294901760
    %747 = vmatpush.msra.mxu0 %v746
    %v748 = vand.u32 %v524, 4294901760
    %749 = vmatpush.msra.mxu0 %v748
    %v750 = vand.u32 %v523, 4294901760
    %751 = vmatpush.msra.mxu0 %v750
    %v752 = vand.u32 %v522, 4294901760
    %753 = vmatpush.msra.mxu0 %v752
    %v754 = vand.u32 %v521, 4294901760
    %755 = vmatpush.msra.mxu0 %v754
    %v756 = vand.u32 %v520, 4294901760
    %757 = vmatpush.msra.mxu0 %v756
    %v758 = vand.u32 %v519, 4294901760
    %759 = vmatpush.msra.mxu0 %v758
    %v760 = vand.u32 %v518, 4294901760
    %761 = vmatpush.msra.mxu0 %v760
    %v762 = vand.u32 %v516, 4294901760
    %v763 = vsub.f32 %v516, %v762
    %v764 = vand.u32 %v763, 4294901760
    %765 = vmatmul.f32.gmra.mxu0 %v764
    %v766 = vpop.f32.mrf.mxu0
    %v767 = vadd.f32 %v728, %v766
    %768 = vdwg.mxu0
    %v769 = vand.u32 %v533, 4294901760
    %v770 = vsub.f32 %v533, %v769
    %v771 = vand.u32 %v770, 4294901760
    %772 = vmatpush.msra.mxu0 %v771
    %v773 = vand.u32 %v532, 4294901760
    %v774 = vsub.f32 %v532, %v773
    %v775 = vand.u32 %v774, 4294901760
    %776 = vmatpush.msra.mxu0 %v775
    %v777 = vand.u32 %v531, 4294901760
    %v778 = vsub.f32 %v531, %v777
    %v779 = vand.u32 %v778, 4294901760
    %780 = vmatpush.msra.mxu0 %v779
    %v781 = vand.u32 %v530, 4294901760
    %v782 = vsub.f32 %v530, %v781
    %v783 = vand.u32 %v782, 4294901760
    %784 = vmatpush.msra.mxu0 %v783
    %v785 = vand.u32 %v529, 4294901760
    %v786 = vsub.f32 %v529, %v785
    %v787 = vand.u32 %v786, 4294901760
    %788 = vmatpush.msra.mxu0 %v787
    %v789 = vand.u32 %v528, 4294901760
    %v790 = vsub.f32 %v528, %v789
    %v791 = vand.u32 %v790, 4294901760
    %792 = vmatpush.msra.mxu0 %v791
    %v793 = vand.u32 %v527, 4294901760
    %v794 = vsub.f32 %v527, %v793
    %v795 = vand.u32 %v794, 4294901760
    %796 = vmatpush.msra.mxu0 %v795
    %v797 = vand.u32 %v526, 4294901760
    %v798 = vsub.f32 %v526, %v797
    %v799 = vand.u32 %v798, 4294901760
    %800 = vmatpush.msra.mxu0 %v799
    %v801 = vand.u32 %v525, 4294901760
    %v802 = vsub.f32 %v525, %v801
    %v803 = vand.u32 %v802, 4294901760
    %804 = vmatpush.msra.mxu0 %v803
    %v805 = vand.u32 %v524, 4294901760
    %v806 = vsub.f32 %v524, %v805
    %v807 = vand.u32 %v806, 4294901760
    %808 = vmatpush.msra.mxu0 %v807
    %v809 = vand.u32 %v523, 4294901760
    %v810 = vsub.f32 %v523, %v809
    %v811 = vand.u32 %v810, 4294901760
    %812 = vmatpush.msra.mxu0 %v811
    %v813 = vand.u32 %v522, 4294901760
    %v814 = vsub.f32 %v522, %v813
    %v815 = vand.u32 %v814, 4294901760
    %816 = vmatpush.msra.mxu0 %v815
    %v817 = vand.u32 %v521, 4294901760
    %v818 = vsub.f32 %v521, %v817
    %v819 = vand.u32 %v818, 4294901760
    %820 = vmatpush.msra.mxu0 %v819
    %v821 = vand.u32 %v520, 4294901760
    %v822 = vsub.f32 %v520, %v821
    %v823 = vand.u32 %v822, 4294901760
    %824 = vmatpush.msra.mxu0 %v823
    %v825 = vand.u32 %v519, 4294901760
    %v826 = vsub.f32 %v519, %v825
    %v827 = vand.u32 %v826, 4294901760
    %828 = vmatpush.msra.mxu0 %v827
    %v829 = vand.u32 %v518, 4294901760
    %v830 = vsub.f32 %v518, %v829
    %v831 = vand.u32 %v830, 4294901760
    %832 = vmatpush.msra.mxu0 %v831
    %v833 = vand.u32 %v516, 4294901760
    %834 = vmatmul.f32.gmra.mxu0 %v833
    %v835 = vpop.f32.mrf.mxu0
    %v836 = vadd.f32 %v767, %v835
    %837 = vdwg.mxu0
    %v838 = vand.u32 %v533, 4294901760
    %839 = vmatpush.msra.mxu0 %v838
    %v840 = vand.u32 %v532, 4294901760
    %841 = vmatpush.msra.mxu0 %v840
    %v842 = vand.u32 %v531, 4294901760
    %843 = vmatpush.msra.mxu0 %v842
    %v844 = vand.u32 %v530, 4294901760
    %845 = vmatpush.msra.mxu0 %v844
    %v846 = vand.u32 %v529, 4294901760
    %847 = vmatpush.msra.mxu0 %v846
    %v848 = vand.u32 %v528, 4294901760
    %849 = vmatpush.msra.mxu0 %v848
    %v850 = vand.u32 %v527, 4294901760
    %851 = vmatpush.msra.mxu0 %v850
    %v852 = vand.u32 %v526, 4294901760
    %853 = vmatpush.msra.mxu0 %v852
    %v854 = vand.u32 %v525, 4294901760
    %855 = vmatpush.msra.mxu0 %v854
    %v856 = vand.u32 %v524, 4294901760
    %857 = vmatpush.msra.mxu0 %v856
    %v858 = vand.u32 %v523, 4294901760
    %859 = vmatpush.msra.mxu0 %v858
    %v860 = vand.u32 %v522, 4294901760
    %861 = vmatpush.msra.mxu0 %v860
    %v862 = vand.u32 %v521, 4294901760
    %863 = vmatpush.msra.mxu0 %v862
    %v864 = vand.u32 %v520, 4294901760
    %865 = vmatpush.msra.mxu0 %v864
    %v866 = vand.u32 %v519, 4294901760
    %867 = vmatpush.msra.mxu0 %v866
    %v868 = vand.u32 %v518, 4294901760
    %869 = vmatpush.msra.mxu0 %v868
    %v870 = vand.u32 %v516, 4294901760
    %871 = vmatmul.f32.gmra.mxu0 %v870
    %v872 = vpop.f32.mrf.mxu0
    %v873 = vadd.f32 %v836, %v872
    %874 = vdwg.mxu0
    %v875 = vmul.f32 %v516, %v516
    %v876 = vand.u32 %v533, 4294901760
    %877 = vmatpush.msra.mxu0 %v876
    %v878 = vand.u32 %v532, 4294901760
    %879 = vmatpush.msra.mxu0 %v878
    %v880 = vand.u32 %v531, 4294901760
    %881 = vmatpush.msra.mxu0 %v880
    %v882 = vand.u32 %v530, 4294901760
    %883 = vmatpush.msra.mxu0 %v882
    %v884 = vand.u32 %v529, 4294901760
    %885 = vmatpush.msra.mxu0 %v884
    %v886 = vand.u32 %v528, 4294901760
    %887 = vmatpush.msra.mxu0 %v886
    %v888 = vand.u32 %v527, 4294901760
    %889 = vmatpush.msra.mxu0 %v888
    %v890 = vand.u32 %v526, 4294901760
    %891 = vmatpush.msra.mxu0 %v890
    %v892 = vand.u32 %v525, 4294901760
    %893 = vmatpush.msra.mxu0 %v892
    %v894 = vand.u32 %v524, 4294901760
    %895 = vmatpush.msra.mxu0 %v894
    %v896 = vand.u32 %v523, 4294901760
    %897 = vmatpush.msra.mxu0 %v896
    %v898 = vand.u32 %v522, 4294901760
    %899 = vmatpush.msra.mxu0 %v898
    %v900 = vand.u32 %v521, 4294901760
    %901 = vmatpush.msra.mxu0 %v900
    %v902 = vand.u32 %v520, 4294901760
    %903 = vmatpush.msra.mxu0 %v902
    %v904 = vand.u32 %v519, 4294901760
    %905 = vmatpush.msra.mxu0 %v904
    %v906 = vand.u32 %v518, 4294901760
    %907 = vmatpush.msra.mxu0 %v906
    %v908 = vand.u32 %v875, 4294901760
    %v909 = vsub.f32 %v875, %v908
    %v910 = vand.u32 %v909, 4294901760
    %v911 = vsub.f32 %v909, %v910
    %v912 = vand.u32 %v911, 4294901760
    %913 = vmatmul.f32.gmra.mxu0 %v912
    %v914 = vpop.f32.mrf.mxu0
    %v915 = vadd.f32 0.0, %v914
    %916 = vdwg.mxu0
    %v917 = vand.u32 %v533, 4294901760
    %v918 = vsub.f32 %v533, %v917
    %v919 = vand.u32 %v918, 4294901760
    %v920 = vsub.f32 %v918, %v919
    %v921 = vand.u32 %v920, 4294901760
    %922 = vmatpush.msra.mxu0 %v921
    %v923 = vand.u32 %v532, 4294901760
    %v924 = vsub.f32 %v532, %v923
    %v925 = vand.u32 %v924, 4294901760
    %v926 = vsub.f32 %v924, %v925
    %v927 = vand.u32 %v926, 4294901760
    %928 = vmatpush.msra.mxu0 %v927
    %v929 = vand.u32 %v531, 4294901760
    %v930 = vsub.f32 %v531, %v929
    %v931 = vand.u32 %v930, 4294901760
    %v932 = vsub.f32 %v930, %v931
    %v933 = vand.u32 %v932, 4294901760
    %934 = vmatpush.msra.mxu0 %v933
    %v935 = vand.u32 %v530, 4294901760
    %v936 = vsub.f32 %v530, %v935
    %v937 = vand.u32 %v936, 4294901760
    %v938 = vsub.f32 %v936, %v937
    %v939 = vand.u32 %v938, 4294901760
    %940 = vmatpush.msra.mxu0 %v939
    %v941 = vand.u32 %v529, 4294901760
    %v942 = vsub.f32 %v529, %v941
    %v943 = vand.u32 %v942, 4294901760
    %v944 = vsub.f32 %v942, %v943
    %v945 = vand.u32 %v944, 4294901760
    %946 = vmatpush.msra.mxu0 %v945
    %v947 = vand.u32 %v528, 4294901760
    %v948 = vsub.f32 %v528, %v947
    %v949 = vand.u32 %v948, 4294901760
    %v950 = vsub.f32 %v948, %v949
    %v951 = vand.u32 %v950, 4294901760
    %952 = vmatpush.msra.mxu0 %v951
    %v953 = vand.u32 %v527, 4294901760
    %v954 = vsub.f32 %v527, %v953
    %v955 = vand.u32 %v954, 4294901760
    %v956 = vsub.f32 %v954, %v955
    %v957 = vand.u32 %v956, 4294901760
    %958 = vmatpush.msra.mxu0 %v957
    %v959 = vand.u32 %v526, 4294901760
    %v960 = vsub.f32 %v526, %v959
    %v961 = vand.u32 %v960, 4294901760
    %v962 = vsub.f32 %v960, %v961
    %v963 = vand.u32 %v962, 4294901760
    %964 = vmatpush.msra.mxu0 %v963
    %v965 = vand.u32 %v525, 4294901760
    %v966 = vsub.f32 %v525, %v965
    %v967 = vand.u32 %v966, 4294901760
    %v968 = vsub.f32 %v966, %v967
    %v969 = vand.u32 %v968, 4294901760
    %970 = vmatpush.msra.mxu0 %v969
    %v971 = vand.u32 %v524, 4294901760
    %v972 = vsub.f32 %v524, %v971
    %v973 = vand.u32 %v972, 4294901760
    %v974 = vsub.f32 %v972, %v973
    %v975 = vand.u32 %v974, 4294901760
    %976 = vmatpush.msra.mxu0 %v975
    %v977 = vand.u32 %v523, 4294901760
    %v978 = vsub.f32 %v523, %v977
    %v979 = vand.u32 %v978, 4294901760
    %v980 = vsub.f32 %v978, %v979
    %v981 = vand.u32 %v980, 4294901760
    %982 = vmatpush.msra.mxu0 %v981
    %v983 = vand.u32 %v522, 4294901760
    %v984 = vsub.f32 %v522, %v983
    %v985 = vand.u32 %v984, 4294901760
    %v986 = vsub.f32 %v984, %v985
    %v987 = vand.u32 %v986, 4294901760
    %988 = vmatpush.msra.mxu0 %v987
    %v989 = vand.u32 %v521, 4294901760
    %v990 = vsub.f32 %v521, %v989
    %v991 = vand.u32 %v990, 4294901760
    %v992 = vsub.f32 %v990, %v991
    %v993 = vand.u32 %v992, 4294901760
    %994 = vmatpush.msra.mxu0 %v993
    %v995 = vand.u32 %v520, 4294901760
    %v996 = vsub.f32 %v520, %v995
    %v997 = vand.u32 %v996, 4294901760
    %v998 = vsub.f32 %v996, %v997
    %v999 = vand.u32 %v998, 4294901760
    %1000 = vmatpush.msra.mxu0 %v999
    %v1001 = vand.u32 %v519, 4294901760
    %v1002 = vsub.f32 %v519, %v1001
    %v1003 = vand.u32 %v1002, 4294901760
    %v1004 = vsub.f32 %v1002, %v1003
    %v1005 = vand.u32 %v1004, 4294901760
    %1006 = vmatpush.msra.mxu0 %v1005
    %v1007 = vand.u32 %v518, 4294901760
    %v1008 = vsub.f32 %v518, %v1007
    %v1009 = vand.u32 %v1008, 4294901760
    %v1010 = vsub.f32 %v1008, %v1009
    %v1011 = vand.u32 %v1010, 4294901760
    %1012 = vmatpush.msra.mxu0 %v1011
    %v1013 = vand.u32 %v875, 4294901760
    %1014 = vmatmul.f32.gmra.mxu0 %v1013
    %v1015 = vpop.f32.mrf.mxu0
    %v1016 = vadd.f32 %v915, %v1015
    %1017 = vdwg.mxu0
    %v1018 = vand.u32 %v533, 4294901760
    %v1019 = vsub.f32 %v533, %v1018
    %1020 = vmatpush.msra.mxu0 %v1019
    %v1021 = vand.u32 %v532, 4294901760
    %v1022 = vsub.f32 %v532, %v1021
    %1023 = vmatpush.msra.mxu0 %v1022
    %v1024 = vand.u32 %v531, 4294901760
    %v1025 = vsub.f32 %v531, %v1024
    %1026 = vmatpush.msra.mxu0 %v1025
    %v1027 = vand.u32 %v530, 4294901760
    %v1028 = vsub.f32 %v530, %v1027
    %1029 = vmatpush.msra.mxu0 %v1028
    %v1030 = vand.u32 %v529, 4294901760
    %v1031 = vsub.f32 %v529, %v1030
    %1032 = vmatpush.msra.mxu0 %v1031
    %v1033 = vand.u32 %v528, 4294901760
    %v1034 = vsub.f32 %v528, %v1033
    %1035 = vmatpush.msra.mxu0 %v1034
    %v1036 = vand.u32 %v527, 4294901760
    %v1037 = vsub.f32 %v527, %v1036
    %1038 = vmatpush.msra.mxu0 %v1037
    %v1039 = vand.u32 %v526, 4294901760
    %v1040 = vsub.f32 %v526, %v1039
    %1041 = vmatpush.msra.mxu0 %v1040
    %v1042 = vand.u32 %v525, 4294901760
    %v1043 = vsub.f32 %v525, %v1042
    %1044 = vmatpush.msra.mxu0 %v1043
    %v1045 = vand.u32 %v524, 4294901760
    %v1046 = vsub.f32 %v524, %v1045
    %1047 = vmatpush.msra.mxu0 %v1046
    %v1048 = vand.u32 %v523, 4294901760
    %v1049 = vsub.f32 %v523, %v1048
    %1050 = vmatpush.msra.mxu0 %v1049
    %v1051 = vand.u32 %v522, 4294901760
    %v1052 = vsub.f32 %v522, %v1051
    %1053 = vmatpush.msra.mxu0 %v1052
    %v1054 = vand.u32 %v521, 4294901760
    %v1055 = vsub.f32 %v521, %v1054
    %1056 = vmatpush.msra.mxu0 %v1055
    %v1057 = vand.u32 %v520, 4294901760
    %v1058 = vsub.f32 %v520, %v1057
    %1059 = vmatpush.msra.mxu0 %v1058
    %v1060 = vand.u32 %v519, 4294901760
    %v1061 = vsub.f32 %v519, %v1060
    %1062 = vmatpush.msra.mxu0 %v1061
    %v1063 = vand.u32 %v518, 4294901760
    %v1064 = vsub.f32 %v518, %v1063
    %1065 = vmatpush.msra.mxu0 %v1064
    %v1066 = vand.u32 %v875, 4294901760
    %v1067 = vsub.f32 %v875, %v1066
    %1068 = vmatmul.f32.gmra.mxu0 %v1067
    %v1069 = vpop.f32.mrf.mxu0
    %v1070 = vadd.f32 %v1016, %v1069
    %1071 = vdwg.mxu0
    %v1072 = vand.u32 %v533, 4294901760
    %1073 = vmatpush.msra.mxu0 %v1072
    %v1074 = vand.u32 %v532, 4294901760
    %1075 = vmatpush.msra.mxu0 %v1074
    %v1076 = vand.u32 %v531, 4294901760
    %1077 = vmatpush.msra.mxu0 %v1076
    %v1078 = vand.u32 %v530, 4294901760
    %1079 = vmatpush.msra.mxu0 %v1078
    %v1080 = vand.u32 %v529, 4294901760
    %1081 = vmatpush.msra.mxu0 %v1080
    %v1082 = vand.u32 %v528, 4294901760
    %1083 = vmatpush.msra.mxu0 %v1082
    %v1084 = vand.u32 %v527, 4294901760
    %1085 = vmatpush.msra.mxu0 %v1084
    %v1086 = vand.u32 %v526, 4294901760
    %1087 = vmatpush.msra.mxu0 %v1086
    %v1088 = vand.u32 %v525, 4294901760
    %1089 = vmatpush.msra.mxu0 %v1088
    %v1090 = vand.u32 %v524, 4294901760
    %1091 = vmatpush.msra.mxu0 %v1090
    %v1092 = vand.u32 %v523, 4294901760
    %1093 = vmatpush.msra.mxu0 %v1092
    %v1094 = vand.u32 %v522, 4294901760
    %1095 = vmatpush.msra.mxu0 %v1094
    %v1096 = vand.u32 %v521, 4294901760
    %1097 = vmatpush.msra.mxu0 %v1096
    %v1098 = vand.u32 %v520, 4294901760
    %1099 = vmatpush.msra.mxu0 %v1098
    %v1100 = vand.u32 %v519, 4294901760
    %1101 = vmatpush.msra.mxu0 %v1100
    %v1102 = vand.u32 %v518, 4294901760
    %1103 = vmatpush.msra.mxu0 %v1102
    %v1104 = vand.u32 %v875, 4294901760
    %v1105 = vsub.f32 %v875, %v1104
    %v1106 = vand.u32 %v1105, 4294901760
    %1107 = vmatmul.f32.gmra.mxu0 %v1106
    %v1108 = vpop.f32.mrf.mxu0
    %v1109 = vadd.f32 %v1070, %v1108
    %1110 = vdwg.mxu0
    %v1111 = vand.u32 %v533, 4294901760
    %v1112 = vsub.f32 %v533, %v1111
    %v1113 = vand.u32 %v1112, 4294901760
    %1114 = vmatpush.msra.mxu0 %v1113
    %v1115 = vand.u32 %v532, 4294901760
    %v1116 = vsub.f32 %v532, %v1115
    %v1117 = vand.u32 %v1116, 4294901760
    %1118 = vmatpush.msra.mxu0 %v1117
    %v1119 = vand.u32 %v531, 4294901760
    %v1120 = vsub.f32 %v531, %v1119
    %v1121 = vand.u32 %v1120, 4294901760
    %1122 = vmatpush.msra.mxu0 %v1121
    %v1123 = vand.u32 %v530, 4294901760
    %v1124 = vsub.f32 %v530, %v1123
    %v1125 = vand.u32 %v1124, 4294901760
    %1126 = vmatpush.msra.mxu0 %v1125
    %v1127 = vand.u32 %v529, 4294901760
    %v1128 = vsub.f32 %v529, %v1127
    %v1129 = vand.u32 %v1128, 4294901760
    %1130 = vmatpush.msra.mxu0 %v1129
    %v1131 = vand.u32 %v528, 4294901760
    %v1132 = vsub.f32 %v528, %v1131
    %v1133 = vand.u32 %v1132, 4294901760
    %1134 = vmatpush.msra.mxu0 %v1133
    %v1135 = vand.u32 %v527, 4294901760
    %v1136 = vsub.f32 %v527, %v1135
    %v1137 = vand.u32 %v1136, 4294901760
    %1138 = vmatpush.msra.mxu0 %v1137
    %v1139 = vand.u32 %v526, 4294901760
    %v1140 = vsub.f32 %v526, %v1139
    %v1141 = vand.u32 %v1140, 4294901760
    %1142 = vmatpush.msra.mxu0 %v1141
    %v1143 = vand.u32 %v525, 4294901760
    %v1144 = vsub.f32 %v525, %v1143
    %v1145 = vand.u32 %v1144, 4294901760
    %1146 = vmatpush.msra.mxu0 %v1145
    %v1147 = vand.u32 %v524, 4294901760
    %v1148 = vsub.f32 %v524, %v1147
    %v1149 = vand.u32 %v1148, 4294901760
    %1150 = vmatpush.msra.mxu0 %v1149
    %v1151 = vand.u32 %v523, 4294901760
    %v1152 = vsub.f32 %v523, %v1151
    %v1153 = vand.u32 %v1152, 4294901760
    %1154 = vmatpush.msra.mxu0 %v1153
    %v1155 = vand.u32 %v522, 4294901760
    %v1156 = vsub.f32 %v522, %v1155
    %v1157 = vand.u32 %v1156, 4294901760
    %1158 = vmatpush.msra.mxu0 %v1157
    %v1159 = vand.u32 %v521, 4294901760
    %v1160 = vsub.f32 %v521, %v1159
    %v1161 = vand.u32 %v1160, 4294901760
    %1162 = vmatpush.msra.mxu0 %v1161
    %v1163 = vand.u32 %v520, 4294901760
    %v1164 = vsub.f32 %v520, %v1163
    %v1165 = vand.u32 %v1164, 4294901760
    %1166 = vmatpush.msra.mxu0 %v1165
    %v1167 = vand.u32 %v519, 4294901760
    %v1168 = vsub.f32 %v519, %v1167
    %v1169 = vand.u32 %v1168, 4294901760
    %1170 = vmatpush.msra.mxu0 %v1169
    %v1171 = vand.u32 %v518, 4294901760
    %v1172 = vsub.f32 %v518, %v1171
    %v1173 = vand.u32 %v1172, 4294901760
    %1174 = vmatpush.msra.mxu0 %v1173
    %v1175 = vand.u32 %v875, 4294901760
    %1176 = vmatmul.f32.gmra.mxu0 %v1175
    %v1177 = vpop.f32.mrf.mxu0
    %v1178 = vadd.f32 %v1109, %v1177
    %1179 = vdwg.mxu0
    %v1180 = vand.u32 %v533, 4294901760
    %1181 = vmatpush.msra.mxu0 %v1180
    %v1182 = vand.u32 %v532, 4294901760
    %1183 = vmatpush.msra.mxu0 %v1182
    %v1184 = vand.u32 %v531, 4294901760
    %1185 = vmatpush.msra.mxu0 %v1184
    %v1186 = vand.u32 %v530, 4294901760
    %1187 = vmatpush.msra.mxu0 %v1186
    %v1188 = vand.u32 %v529, 4294901760
    %1189 = vmatpush.msra.mxu0 %v1188
    %v1190 = vand.u32 %v528, 4294901760
    %1191 = vmatpush.msra.mxu0 %v1190
    %v1192 = vand.u32 %v527, 4294901760
    %1193 = vmatpush.msra.mxu0 %v1192
    %v1194 = vand.u32 %v526, 4294901760
    %1195 = vmatpush.msra.mxu0 %v1194
    %v1196 = vand.u32 %v525, 4294901760
    %1197 = vmatpush.msra.mxu0 %v1196
    %v1198 = vand.u32 %v524, 4294901760
    %1199 = vmatpush.msra.mxu0 %v1198
    %v1200 = vand.u32 %v523, 4294901760
    %1201 = vmatpush.msra.mxu0 %v1200
    %v1202 = vand.u32 %v522, 4294901760
    %1203 = vmatpush.msra.mxu0 %v1202
    %v1204 = vand.u32 %v521, 4294901760
    %1205 = vmatpush.msra.mxu0 %v1204
    %v1206 = vand.u32 %v520, 4294901760
    %1207 = vmatpush.msra.mxu0 %v1206
    %v1208 = vand.u32 %v519, 4294901760
    %1209 = vmatpush.msra.mxu0 %v1208
    %v1210 = vand.u32 %v518, 4294901760
    %1211 = vmatpush.msra.mxu0 %v1210
    %v1212 = vand.u32 %v875, 4294901760
    %1213 = vmatmul.f32.gmra.mxu0 %v1212
    %v1214 = vpop.f32.mrf.mxu0
    %v1215 = vadd.f32 %v1178, %v1214
    %1216 = vdwg.mxu0
    %v1217 = vmul.f32 %v873, 0.03125
    %v1218 = vmul.f32 %v1215, 0.03125
    %v1219 = vmul.f32 %v1217, %v1217
    %v1220 = vsub.f32 %v1218, %v1219
    %v1221 = vsub.f32 %v516, %v1217
    %v1222 = vadd.f32 %v1220, 1e-05
    %v1223 = vrsqrt.pop %v1222
    %v1224 = vmul.f32 %v1223, %v1222
    %v1225 = vmul.f32 %v1224, %v1223
    %v1226 = vmul.f32 0.5, %v1225
    %v1227 = vsub.f32 1.5, %v1226
    %v1228 = vmul.f32 %v1223, %v1227
    %vm1229 = vweird.f32 %v1222
    %vm1230 = vweird.f32 %v1223
    %vm1231 = vmor %vm1229, %vm1230
    %v1232 = vsel %vm1231, %v1223, %v1228
    %v1233 = vmul.f32 %v1221, %v1232
    %v1234 = vld [vmem:[#allocation11] sm:$0x1]
    %v1236 = vperm.slane %v1234, 0
    %v1238 = vmul.f32 %v1233, %v1236
    %v1239 = vld [vmem:[#allocation13] sm:$0x1]
    %v1241 = vperm.slane %v1239, 0
    %v1243 = vadd.f32 %v1238, %v1241
    %v1244 = vtanh.pop %v1243
    loop: start=0, step=1, limit=7
    $region70: #{tpu_custom_call.1} parent=1 // loop_pre_header
      _
    $region71: #{tpu_custom_call.1} parent=1 // loop_header
      %s1246 = sphi 0, %s1250
      %p1247 = scmp.ge.s32.totalorder %s1246, 7
      %v1251 = vphi %v1244, %v2345
    $region72: #{tpu_custom_call.1} parent=1 // loop_header_branch
      %1249 = sbr.rel (%p1247) target = $region76
    $region73: #{tpu_custom_call.1} parent=1 // loop_body
      %s1252 = smul.u32 %s1246, 128
      %s1253 = scalar_lea.vmem [#allocation7], %s1252
      %v1254 = vld [vmem:[%s1253] sm:$0xff]
      %v1255 = vld [vmem:[%s1253 + $0x8] sm:$0xff]
      %v1256 = vld [vmem:[%s1253 + $0x10] sm:$0xff]
      %v1257 = vld [vmem:[%s1253 + $0x18] sm:$0xff]
      %v1258 = vld [vmem:[%s1253 + $0x20] sm:$0xff]
      %v1259 = vld [vmem:[%s1253 + $0x28] sm:$0xff]
      %v1260 = vld [vmem:[%s1253 + $0x30] sm:$0xff]
      %v1261 = vld [vmem:[%s1253 + $0x38] sm:$0xff]
      %v1262 = vld [vmem:[%s1253 + $0x40] sm:$0xff]
      %v1263 = vld [vmem:[%s1253 + $0x48] sm:$0xff]
      %v1264 = vld [vmem:[%s1253 + $0x50] sm:$0xff]
      %v1265 = vld [vmem:[%s1253 + $0x58] sm:$0xff]
      %v1266 = vld [vmem:[%s1253 + $0x60] sm:$0xff]
      %v1267 = vld [vmem:[%s1253 + $0x68] sm:$0xff]
      %v1268 = vld [vmem:[%s1253 + $0x70] sm:$0xff]
      %v1269 = vld [vmem:[%s1253 + $0x78] sm:$0xff]
      %s1270 = sadd.s32 %s1246, 1
      %s1271 = scalar_lea.vmem [#allocation10], %s1270
      %v1272 = vld [vmem:[%s1271] sm:$0x1]
      %v1274 = vperm.slane %v1272, 0
      %v1276 = vand.u32 %v1269, 4294901760
      %1277 = vmatpush.msra.mxu0 %v1276
      %v1278 = vand.u32 %v1268, 4294901760
      %1279 = vmatpush.msra.mxu0 %v1278
      %v1280 = vand.u32 %v1267, 4294901760
      %1281 = vmatpush.msra.mxu0 %v1280
      %v1282 = vand.u32 %v1266, 4294901760
      %1283 = vmatpush.msra.mxu0 %v1282
      %v1284 = vand.u32 %v1265, 4294901760
      %1285 = vmatpush.msra.mxu0 %v1284
      %v1286 = vand.u32 %v1264, 4294901760
      %1287 = vmatpush.msra.mxu0 %v1286
      %v1288 = vand.u32 %v1263, 4294901760
      %1289 = vmatpush.msra.mxu0 %v1288
      %v1290 = vand.u32 %v1262, 4294901760
      %1291 = vmatpush.msra.mxu0 %v1290
      %v1292 = vand.u32 %v1261, 4294901760
      %1293 = vmatpush.msra.mxu0 %v1292
      %v1294 = vand.u32 %v1260, 4294901760
      %1295 = vmatpush.msra.mxu0 %v1294
      %v1296 = vand.u32 %v1259, 4294901760
      %1297 = vmatpush.msra.mxu0 %v1296
      %v1298 = vand.u32 %v1258, 4294901760
      %1299 = vmatpush.msra.mxu0 %v1298
      %v1300 = vand.u32 %v1257, 4294901760
      %1301 = vmatpush.msra.mxu0 %v1300
      %v1302 = vand.u32 %v1256, 4294901760
      %1303 = vmatpush.msra.mxu0 %v1302
      %v1304 = vand.u32 %v1255, 4294901760
      %1305 = vmatpush.msra.mxu0 %v1304
      %v1306 = vand.u32 %v1254, 4294901760
      %1307 = vmatpush.msra.mxu0 %v1306
      %v1308 = vand.u32 %v1251, 4294901760
      %v1309 = vsub.f32 %v1251, %v1308
      %v1310 = vand.u32 %v1309, 4294901760
      %v1311 = vsub.f32 %v1309, %v1310
      %v1312 = vand.u32 %v1311, 4294901760
      %1313 = vmatmul.f32.gmra.mxu0 %v1312
      %v1314 = vpop.f32.mrf.mxu0
      %v1315 = vadd.f32 %v1274, %v1314
      %1316 = vdwg.mxu0
      %v1317 = vand.u32 %v1269, 4294901760
      %v1318 = vsub.f32 %v1269, %v1317
      %v1319 = vand.u32 %v1318, 4294901760
      %v1320 = vsub.f32 %v1318, %v1319
      %v1321 = vand.u32 %v1320, 4294901760
      %1322 = vmatpush.msra.mxu0 %v1321
      %v1323 = vand.u32 %v1268, 4294901760
      %v1324 = vsub.f32 %v1268, %v1323
      %v1325 = vand.u32 %v1324, 4294901760
      %v1326 = vsub.f32 %v1324, %v1325
      %v1327 = vand.u32 %v1326, 4294901760
      %1328 = vmatpush.msra.mxu0 %v1327
      %v1329 = vand.u32 %v1267, 4294901760
      %v1330 = vsub.f32 %v1267, %v1329
      %v1331 = vand.u32 %v1330, 4294901760
      %v1332 = vsub.f32 %v1330, %v1331
      %v1333 = vand.u32 %v1332, 4294901760
      %1334 = vmatpush.msra.mxu0 %v1333
      %v1335 = vand.u32 %v1266, 4294901760
      %v1336 = vsub.f32 %v1266, %v1335
      %v1337 = vand.u32 %v1336, 4294901760
      %v1338 = vsub.f32 %v1336, %v1337
      %v1339 = vand.u32 %v1338, 4294901760
      %1340 = vmatpush.msra.mxu0 %v1339
      %v1341 = vand.u32 %v1265, 4294901760
      %v1342 = vsub.f32 %v1265, %v1341
      %v1343 = vand.u32 %v1342, 4294901760
      %v1344 = vsub.f32 %v1342, %v1343
      %v1345 = vand.u32 %v1344, 4294901760
      %1346 = vmatpush.msra.mxu0 %v1345
      %v1347 = vand.u32 %v1264, 4294901760
      %v1348 = vsub.f32 %v1264, %v1347
      %v1349 = vand.u32 %v1348, 4294901760
      %v1350 = vsub.f32 %v1348, %v1349
      %v1351 = vand.u32 %v1350, 4294901760
      %1352 = vmatpush.msra.mxu0 %v1351
      %v1353 = vand.u32 %v1263, 4294901760
      %v1354 = vsub.f32 %v1263, %v1353
      %v1355 = vand.u32 %v1354, 4294901760
      %v1356 = vsub.f32 %v1354, %v1355
      %v1357 = vand.u32 %v1356, 4294901760
      %1358 = vmatpush.msra.mxu0 %v1357
      %v1359 = vand.u32 %v1262, 4294901760
      %v1360 = vsub.f32 %v1262, %v1359
      %v1361 = vand.u32 %v1360, 4294901760
      %v1362 = vsub.f32 %v1360, %v1361
      %v1363 = vand.u32 %v1362, 4294901760
      %1364 = vmatpush.msra.mxu0 %v1363
      %v1365 = vand.u32 %v1261, 4294901760
      %v1366 = vsub.f32 %v1261, %v1365
      %v1367 = vand.u32 %v1366, 4294901760
      %v1368 = vsub.f32 %v1366, %v1367
      %v1369 = vand.u32 %v1368, 4294901760
      %1370 = vmatpush.msra.mxu0 %v1369
      %v1371 = vand.u32 %v1260, 4294901760
      %v1372 = vsub.f32 %v1260, %v1371
      %v1373 = vand.u32 %v1372, 4294901760
      %v1374 = vsub.f32 %v1372, %v1373
      %v1375 = vand.u32 %v1374, 4294901760
      %1376 = vmatpush.msra.mxu0 %v1375
      %v1377 = vand.u32 %v1259, 4294901760
      %v1378 = vsub.f32 %v1259, %v1377
      %v1379 = vand.u32 %v1378, 4294901760
      %v1380 = vsub.f32 %v1378, %v1379
      %v1381 = vand.u32 %v1380, 4294901760
      %1382 = vmatpush.msra.mxu0 %v1381
      %v1383 = vand.u32 %v1258, 4294901760
      %v1384 = vsub.f32 %v1258, %v1383
      %v1385 = vand.u32 %v1384, 4294901760
      %v1386 = vsub.f32 %v1384, %v1385
      %v1387 = vand.u32 %v1386, 4294901760
      %1388 = vmatpush.msra.mxu0 %v1387
      %v1389 = vand.u32 %v1257, 4294901760
      %v1390 = vsub.f32 %v1257, %v1389
      %v1391 = vand.u32 %v1390, 4294901760
      %v1392 = vsub.f32 %v1390, %v1391
      %v1393 = vand.u32 %v1392, 4294901760
      %1394 = vmatpush.msra.mxu0 %v1393
      %v1395 = vand.u32 %v1256, 4294901760
      %v1396 = vsub.f32 %v1256, %v1395
      %v1397 = vand.u32 %v1396, 4294901760
      %v1398 = vsub.f32 %v1396, %v1397
      %v1399 = vand.u32 %v1398, 4294901760
      %1400 = vmatpush.msra.mxu0 %v1399
      %v1401 = vand.u32 %v1255, 4294901760
      %v1402 = vsub.f32 %v1255, %v1401
      %v1403 = vand.u32 %v1402, 4294901760
      %v1404 = vsub.f32 %v1402, %v1403
      %v1405 = vand.u32 %v1404, 4294901760
      %1406 = vmatpush.msra.mxu0 %v1405
      %v1407 = vand.u32 %v1254, 4294901760
      %v1408 = vsub.f32 %v1254, %v1407
      %v1409 = vand.u32 %v1408, 4294901760
      %v1410 = vsub.f32 %v1408, %v1409
      %v1411 = vand.u32 %v1410, 4294901760
      %1412 = vmatpush.msra.mxu0 %v1411
      %v1413 = vand.u32 %v1251, 4294901760
      %1414 = vmatmul.f32.gmra.mxu0 %v1413
      %v1415 = vpop.f32.mrf.mxu0
      %v1416 = vadd.f32 %v1315, %v1415
      %1417 = vdwg.mxu0
      %v1418 = vand.u32 %v1269, 4294901760
      %v1419 = vsub.f32 %v1269, %v1418
      %1420 = vmatpush.msra.mxu0 %v1419
      %v1421 = vand.u32 %v1268, 4294901760
      %v1422 = vsub.f32 %v1268, %v1421
      %1423 = vmatpush.msra.mxu0 %v1422
      %v1424 = vand.u32 %v1267, 4294901760
      %v1425 = vsub.f32 %v1267, %v1424
      %1426 = vmatpush.msra.mxu0 %v1425
      %v1427 = vand.u32 %v1266, 4294901760
      %v1428 = vsub.f32 %v1266, %v1427
      %1429 = vmatpush.msra.mxu0 %v1428
      %v1430 = vand.u32 %v1265, 4294901760
      %v1431 = vsub.f32 %v1265, %v1430
      %1432 = vmatpush.msra.mxu0 %v1431
      %v1433 = vand.u32 %v1264, 4294901760
      %v1434 = vsub.f32 %v1264, %v1433
      %1435 = vmatpush.msra.mxu0 %v1434
      %v1436 = vand.u32 %v1263, 4294901760
      %v1437 = vsub.f32 %v1263, %v1436
      %1438 = vmatpush.msra.mxu0 %v1437
      %v1439 = vand.u32 %v1262, 4294901760
      %v1440 = vsub.f32 %v1262, %v1439
      %1441 = vmatpush.msra.mxu0 %v1440
      %v1442 = vand.u32 %v1261, 4294901760
      %v1443 = vsub.f32 %v1261, %v1442
      %1444 = vmatpush.msra.mxu0 %v1443
      %v1445 = vand.u32 %v1260, 4294901760
      %v1446 = vsub.f32 %v1260, %v1445
      %1447 = vmatpush.msra.mxu0 %v1446
      %v1448 = vand.u32 %v1259, 4294901760
      %v1449 = vsub.f32 %v1259, %v1448
      %1450 = vmatpush.msra.mxu0 %v1449
      %v1451 = vand.u32 %v1258, 4294901760
      %v1452 = vsub.f32 %v1258, %v1451
      %1453 = vmatpush.msra.mxu0 %v1452
      %v1454 = vand.u32 %v1257, 4294901760
      %v1455 = vsub.f32 %v1257, %v1454
      %1456 = vmatpush.msra.mxu0 %v1455
      %v1457 = vand.u32 %v1256, 4294901760
      %v1458 = vsub.f32 %v1256, %v1457
      %1459 = vmatpush.msra.mxu0 %v1458
      %v1460 = vand.u32 %v1255, 4294901760
      %v1461 = vsub.f32 %v1255, %v1460
      %1462 = vmatpush.msra.mxu0 %v1461
      %v1463 = vand.u32 %v1254, 4294901760
      %v1464 = vsub.f32 %v1254, %v1463
      %1465 = vmatpush.msra.mxu0 %v1464
      %v1466 = vand.u32 %v1251, 4294901760
      %v1467 = vsub.f32 %v1251, %v1466
      %1468 = vmatmul.f32.gmra.mxu0 %v1467
      %v1469 = vpop.f32.mrf.mxu0
      %v1470 = vadd.f32 %v1416, %v1469
      %1471 = vdwg.mxu0
      %v1472 = vand.u32 %v1269, 4294901760
      %1473 = vmatpush.msra.mxu0 %v1472
      %v1474 = vand.u32 %v1268, 4294901760
      %1475 = vmatpush.msra.mxu0 %v1474
      %v1476 = vand.u32 %v1267, 4294901760
      %1477 = vmatpush.msra.mxu0 %v1476
      %v1478 = vand.u32 %v1266, 4294901760
      %1479 = vmatpush.msra.mxu0 %v1478
      %v1480 = vand.u32 %v1265, 4294901760
      %1481 = vmatpush.msra.mxu0 %v1480
      %v1482 = vand.u32 %v1264, 4294901760
      %1483 = vmatpush.msra.mxu0 %v1482
      %v1484 = vand.u32 %v1263, 4294901760
      %1485 = vmatpush.msra.mxu0 %v1484
      %v1486 = vand.u32 %v1262, 4294901760
      %1487 = vmatpush.msra.mxu0 %v1486
      %v1488 = vand.u32 %v1261, 4294901760
      %1489 = vmatpush.msra.mxu0 %v1488
      %v1490 = vand.u32 %v1260, 4294901760
      %1491 = vmatpush.msra.mxu0 %v1490
      %v1492 = vand.u32 %v1259, 4294901760
      %1493 = vmatpush.msra.mxu0 %v1492
      %v1494 = vand.u32 %v1258, 4294901760
      %1495 = vmatpush.msra.mxu0 %v1494
      %v1496 = vand.u32 %v1257, 4294901760
      %1497 = vmatpush.msra.mxu0 %v1496
      %v1498 = vand.u32 %v1256, 4294901760
      %1499 = vmatpush.msra.mxu0 %v1498
      %v1500 = vand.u32 %v1255, 4294901760
      %1501 = vmatpush.msra.mxu0 %v1500
      %v1502 = vand.u32 %v1254, 4294901760
      %1503 = vmatpush.msra.mxu0 %v1502
      %v1504 = vand.u32 %v1251, 4294901760
      %v1505 = vsub.f32 %v1251, %v1504
      %v1506 = vand.u32 %v1505, 4294901760
      %1507 = vmatmul.f32.gmra.mxu0 %v1506
      %v1508 = vpop.f32.mrf.mxu0
      %v1509 = vadd.f32 %v1470, %v1508
      %1510 = vdwg.mxu0
      %v1511 = vand.u32 %v1269, 4294901760
      %v1512 = vsub.f32 %v1269, %v1511
      %v1513 = vand.u32 %v1512, 4294901760
      %1514 = vmatpush.msra.mxu0 %v1513
      %v1515 = vand.u32 %v1268, 4294901760
      %v1516 = vsub.f32 %v1268, %v1515
      %v1517 = vand.u32 %v1516, 4294901760
      %1518 = vmatpush.msra.mxu0 %v1517
      %v1519 = vand.u32 %v1267, 4294901760
      %v1520 = vsub.f32 %v1267, %v1519
      %v1521 = vand.u32 %v1520, 4294901760
      %1522 = vmatpush.msra.mxu0 %v1521
      %v1523 = vand.u32 %v1266, 4294901760
      %v1524 = vsub.f32 %v1266, %v1523
      %v1525 = vand.u32 %v1524, 4294901760
      %1526 = vmatpush.msra.mxu0 %v1525
      %v1527 = vand.u32 %v1265, 4294901760
      %v1528 = vsub.f32 %v1265, %v1527
      %v1529 = vand.u32 %v1528, 4294901760
      %1530 = vmatpush.msra.mxu0 %v1529
      %v1531 = vand.u32 %v1264, 4294901760
      %v1532 = vsub.f32 %v1264, %v1531
      %v1533 = vand.u32 %v1532, 4294901760
      %1534 = vmatpush.msra.mxu0 %v1533
      %v1535 = vand.u32 %v1263, 4294901760
      %v1536 = vsub.f32 %v1263, %v1535
      %v1537 = vand.u32 %v1536, 4294901760
      %1538 = vmatpush.msra.mxu0 %v1537
      %v1539 = vand.u32 %v1262, 4294901760
      %v1540 = vsub.f32 %v1262, %v1539
      %v1541 = vand.u32 %v1540, 4294901760
      %1542 = vmatpush.msra.mxu0 %v1541
      %v1543 = vand.u32 %v1261, 4294901760
      %v1544 = vsub.f32 %v1261, %v1543
      %v1545 = vand.u32 %v1544, 4294901760
      %1546 = vmatpush.msra.mxu0 %v1545
      %v1547 = vand.u32 %v1260, 4294901760
      %v1548 = vsub.f32 %v1260, %v1547
      %v1549 = vand.u32 %v1548, 4294901760
      %1550 = vmatpush.msra.mxu0 %v1549
      %v1551 = vand.u32 %v1259, 4294901760
      %v1552 = vsub.f32 %v1259, %v1551
      %v1553 = vand.u32 %v1552, 4294901760
      %1554 = vmatpush.msra.mxu0 %v1553
      %v1555 = vand.u32 %v1258, 4294901760
      %v1556 = vsub.f32 %v1258, %v1555
      %v1557 = vand.u32 %v1556, 4294901760
      %1558 = vmatpush.msra.mxu0 %v1557
      %v1559 = vand.u32 %v1257, 4294901760
      %v1560 = vsub.f32 %v1257, %v1559
      %v1561 = vand.u32 %v1560, 4294901760
      %1562 = vmatpush.msra.mxu0 %v1561
      %v1563 = vand.u32 %v1256, 4294901760
      %v1564 = vsub.f32 %v1256, %v1563
      %v1565 = vand.u32 %v1564, 4294901760
      %1566 = vmatpush.msra.mxu0 %v1565
      %v1567 = vand.u32 %v1255, 4294901760
      %v1568 = vsub.f32 %v1255, %v1567
      %v1569 = vand.u32 %v1568, 4294901760
      %1570 = vmatpush.msra.mxu0 %v1569
      %v1571 = vand.u32 %v1254, 4294901760
      %v1572 = vsub.f32 %v1254, %v1571
      %v1573 = vand.u32 %v1572, 4294901760
      %1574 = vmatpush.msra.mxu0 %v1573
      %v1575 = vand.u32 %v1251, 4294901760
      %1576 = vmatmul.f32.gmra.mxu0 %v1575
      %v1577 = vpop.f32.mrf.mxu0
      %v1578 = vadd.f32 %v1509, %v1577
      %1579 = vdwg.mxu0
      %v1580 = vand.u32 %v1269, 4294901760
      %1581 = vmatpush.msra.mxu0 %v1580
      %v1582 = vand.u32 %v1268, 4294901760
      %1583 = vmatpush.msra.mxu0 %v1582
      %v1584 = vand.u32 %v1267, 4294901760
      %1585 = vmatpush.msra.mxu0 %v1584
      %v1586 = vand.u32 %v1266, 4294901760
      %1587 = vmatpush.msra.mxu0 %v1586
      %v1588 = vand.u32 %v1265, 4294901760
      %1589 = vmatpush.msra.mxu0 %v1588
      %v1590 = vand.u32 %v1264, 4294901760
      %1591 = vmatpush.msra.mxu0 %v1590
      %v1592 = vand.u32 %v1263, 4294901760
      %1593 = vmatpush.msra.mxu0 %v1592
      %v1594 = vand.u32 %v1262, 4294901760
      %1595 = vmatpush.msra.mxu0 %v1594
      %v1596 = vand.u32 %v1261, 4294901760
      %1597 = vmatpush.msra.mxu0 %v1596
      %v1598 = vand.u32 %v1260, 4294901760
      %1599 = vmatpush.msra.mxu0 %v1598
      %v1600 = vand.u32 %v1259, 4294901760
      %1601 = vmatpush.msra.mxu0 %v1600
      %v1602 = vand.u32 %v1258, 4294901760
      %1603 = vmatpush.msra.mxu0 %v1602
      %v1604 = vand.u32 %v1257, 4294901760
      %1605 = vmatpush.msra.mxu0 %v1604
      %v1606 = vand.u32 %v1256, 4294901760
      %1607 = vmatpush.msra.mxu0 %v1606
      %v1608 = vand.u32 %v1255, 4294901760
      %1609 = vmatpush.msra.mxu0 %v1608
      %v1610 = vand.u32 %v1254, 4294901760
      %1611 = vmatpush.msra.mxu0 %v1610
      %v1612 = vand.u32 %v1251, 4294901760
      %1613 = vmatmul.f32.gmra.mxu0 %v1612
      %v1614 = vpop.f32.mrf.mxu0
      %v1615 = vadd.f32 %v1578, %v1614
      %1616 = vdwg.mxu0
      %v1617 = vld [vmem:[#allocation14] sm:$0xff]
      %v1618 = vld [vmem:[#allocation14 + $0x8] sm:$0xff]
      %v1619 = vld [vmem:[#allocation14 + $0x10] sm:$0xff]
      %v1620 = vld [vmem:[#allocation14 + $0x18] sm:$0xff]
      %v1621 = vld [vmem:[#allocation14 + $0x20] sm:$0xff]
      %v1622 = vld [vmem:[#allocation14 + $0x28] sm:$0xff]
      %v1623 = vld [vmem:[#allocation14 + $0x30] sm:$0xff]
      %v1624 = vld [vmem:[#allocation14 + $0x38] sm:$0xff]
      %v1625 = vld [vmem:[#allocation14 + $0x40] sm:$0xff]
      %v1626 = vld [vmem:[#allocation14 + $0x48] sm:$0xff]
      %v1627 = vld [vmem:[#allocation14 + $0x50] sm:$0xff]
      %v1628 = vld [vmem:[#allocation14 + $0x58] sm:$0xff]
      %v1629 = vld [vmem:[#allocation14 + $0x60] sm:$0xff]
      %v1630 = vld [vmem:[#allocation14 + $0x68] sm:$0xff]
      %v1631 = vld [vmem:[#allocation14 + $0x70] sm:$0xff]
      %v1632 = vld [vmem:[#allocation14 + $0x78] sm:$0xff]
      %v1633 = vand.u32 %v1632, 4294901760
      %1634 = vmatpush.msra.mxu0 %v1633
      %v1635 = vand.u32 %v1631, 4294901760
      %1636 = vmatpush.msra.mxu0 %v1635
      %v1637 = vand.u32 %v1630, 4294901760
      %1638 = vmatpush.msra.mxu0 %v1637
      %v1639 = vand.u32 %v1629, 4294901760
      %1640 = vmatpush.msra.mxu0 %v1639
      %v1641 = vand.u32 %v1628, 4294901760
      %1642 = vmatpush.msra.mxu0 %v1641
      %v1643 = vand.u32 %v1627, 4294901760
      %1644 = vmatpush.msra.mxu0 %v1643
      %v1645 = vand.u32 %v1626, 4294901760
      %1646 = vmatpush.msra.mxu0 %v1645
      %v1647 = vand.u32 %v1625, 4294901760
      %1648 = vmatpush.msra.mxu0 %v1647
      %v1649 = vand.u32 %v1624, 4294901760
      %1650 = vmatpush.msra.mxu0 %v1649
      %v1651 = vand.u32 %v1623, 4294901760
      %1652 = vmatpush.msra.mxu0 %v1651
      %v1653 = vand.u32 %v1622, 4294901760
      %1654 = vmatpush.msra.mxu0 %v1653
      %v1655 = vand.u32 %v1621, 4294901760
      %1656 = vmatpush.msra.mxu0 %v1655
      %v1657 = vand.u32 %v1620, 4294901760
      %1658 = vmatpush.msra.mxu0 %v1657
      %v1659 = vand.u32 %v1619, 4294901760
      %1660 = vmatpush.msra.mxu0 %v1659
      %v1661 = vand.u32 %v1618, 4294901760
      %1662 = vmatpush.msra.mxu0 %v1661
      %v1663 = vand.u32 %v1617, 4294901760
      %1664 = vmatpush.msra.mxu0 %v1663
      %v1665 = vand.u32 %v1615, 4294901760
      %v1666 = vsub.f32 %v1615, %v1665
      %v1667 = vand.u32 %v1666, 4294901760
      %v1668 = vsub.f32 %v1666, %v1667
      %v1669 = vand.u32 %v1668, 4294901760
      %1670 = vmatmul.f32.gmra.mxu0 %v1669
      %v1671 = vpop.f32.mrf.mxu0
      %v1672 = vadd.f32 0.0, %v1671
      %1673 = vdwg.mxu0
      %v1674 = vand.u32 %v1632, 4294901760
      %v1675 = vsub.f32 %v1632, %v1674
      %v1676 = vand.u32 %v1675, 4294901760
      %v1677 = vsub.f32 %v1675, %v1676
      %v1678 = vand.u32 %v1677, 4294901760
      %1679 = vmatpush.msra.mxu0 %v1678
      %v1680 = vand.u32 %v1631, 4294901760
      %v1681 = vsub.f32 %v1631, %v1680
      %v1682 = vand.u32 %v1681, 4294901760
      %v1683 = vsub.f32 %v1681, %v1682
      %v1684 = vand.u32 %v1683, 4294901760
      %1685 = vmatpush.msra.mxu0 %v1684
      %v1686 = vand.u32 %v1630, 4294901760
      %v1687 = vsub.f32 %v1630, %v1686
      %v1688 = vand.u32 %v1687, 4294901760
      %v1689 = vsub.f32 %v1687, %v1688
      %v1690 = vand.u32 %v1689, 4294901760
      %1691 = vmatpush.msra.mxu0 %v1690
      %v1692 = vand.u32 %v1629, 4294901760
      %v1693 = vsub.f32 %v1629, %v1692
      %v1694 = vand.u32 %v1693, 4294901760
      %v1695 = vsub.f32 %v1693, %v1694
      %v1696 = vand.u32 %v1695, 4294901760
      %1697 = vmatpush.msra.mxu0 %v1696
      %v1698 = vand.u32 %v1628, 4294901760
      %v1699 = vsub.f32 %v1628, %v1698
      %v1700 = vand.u32 %v1699, 4294901760
      %v1701 = vsub.f32 %v1699, %v1700
      %v1702 = vand.u32 %v1701, 4294901760
      %1703 = vmatpush.msra.mxu0 %v1702
      %v1704 = vand.u32 %v1627, 4294901760
      %v1705 = vsub.f32 %v1627, %v1704
      %v1706 = vand.u32 %v1705, 4294901760
      %v1707 = vsub.f32 %v1705, %v1706
      %v1708 = vand.u32 %v1707, 4294901760
      %1709 = vmatpush.msra.mxu0 %v1708
      %v1710 = vand.u32 %v1626, 4294901760
      %v1711 = vsub.f32 %v1626, %v1710
      %v1712 = vand.u32 %v1711, 4294901760
      %v1713 = vsub.f32 %v1711, %v1712
      %v1714 = vand.u32 %v1713, 4294901760
      %1715 = vmatpush.msra.mxu0 %v1714
      %v1716 = vand.u32 %v1625, 4294901760
      %v1717 = vsub.f32 %v1625, %v1716
      %v1718 = vand.u32 %v1717, 4294901760
      %v1719 = vsub.f32 %v1717, %v1718
      %v1720 = vand.u32 %v1719, 4294901760
      %1721 = vmatpush.msra.mxu0 %v1720
      %v1722 = vand.u32 %v1624, 4294901760
      %v1723 = vsub.f32 %v1624, %v1722
      %v1724 = vand.u32 %v1723, 4294901760
      %v1725 = vsub.f32 %v1723, %v1724
      %v1726 = vand.u32 %v1725, 4294901760
      %1727 = vmatpush.msra.mxu0 %v1726
      %v1728 = vand.u32 %v1623, 4294901760
      %v1729 = vsub.f32 %v1623, %v1728
      %v1730 = vand.u32 %v1729, 4294901760
      %v1731 = vsub.f32 %v1729, %v1730
      %v1732 = vand.u32 %v1731, 4294901760
      %1733 = vmatpush.msra.mxu0 %v1732
      %v1734 = vand.u32 %v1622, 4294901760
      %v1735 = vsub.f32 %v1622, %v1734
      %v1736 = vand.u32 %v1735, 4294901760
      %v1737 = vsub.f32 %v1735, %v1736
      %v1738 = vand.u32 %v1737, 4294901760
      %1739 = vmatpush.msra.mxu0 %v1738
      %v1740 = vand.u32 %v1621, 4294901760
      %v1741 = vsub.f32 %v1621, %v1740
      %v1742 = vand.u32 %v1741, 4294901760
      %v1743 = vsub.f32 %v1741, %v1742
      %v1744 = vand.u32 %v1743, 4294901760
      %1745 = vmatpush.msra.mxu0 %v1744
      %v1746 = vand.u32 %v1620, 4294901760
      %v1747 = vsub.f32 %v1620, %v1746
      %v1748 = vand.u32 %v1747, 4294901760
      %v1749 = vsub.f32 %v1747, %v1748
      %v1750 = vand.u32 %v1749, 4294901760
      %1751 = vmatpush.msra.mxu0 %v1750
      %v1752 = vand.u32 %v1619, 4294901760
      %v1753 = vsub.f32 %v1619, %v1752
      %v1754 = vand.u32 %v1753, 4294901760
      %v1755 = vsub.f32 %v1753, %v1754
      %v1756 = vand.u32 %v1755, 4294901760
      %1757 = vmatpush.msra.mxu0 %v1756
      %v1758 = vand.u32 %v1618, 4294901760
      %v1759 = vsub.f32 %v1618, %v1758
      %v1760 = vand.u32 %v1759, 4294901760
      %v1761 = vsub.f32 %v1759, %v1760
      %v1762 = vand.u32 %v1761, 4294901760
      %1763 = vmatpush.msra.mxu0 %v1762
      %v1764 = vand.u32 %v1617, 4294901760
      %v1765 = vsub.f32 %v1617, %v1764
      %v1766 = vand.u32 %v1765, 4294901760
      %v1767 = vsub.f32 %v1765, %v1766
      %v1768 = vand.u32 %v1767, 4294901760
      %1769 = vmatpush.msra.mxu0 %v1768
      %v1770 = vand.u32 %v1615, 4294901760
      %1771 = vmatmul.f32.gmra.mxu0 %v1770
      %v1772 = vpop.f32.mrf.mxu0
      %v1773 = vadd.f32 %v1672, %v1772
      %1774 = vdwg.mxu0
      %v1775 = vand.u32 %v1632, 4294901760
      %v1776 = vsub.f32 %v1632, %v1775
      %1777 = vmatpush.msra.mxu0 %v1776
      %v1778 = vand.u32 %v1631, 4294901760
      %v1779 = vsub.f32 %v1631, %v1778
      %1780 = vmatpush.msra.mxu0 %v1779
      %v1781 = vand.u32 %v1630, 4294901760
      %v1782 = vsub.f32 %v1630, %v1781
      %1783 = vmatpush.msra.mxu0 %v1782
      %v1784 = vand.u32 %v1629, 4294901760
      %v1785 = vsub.f32 %v1629, %v1784
      %1786 = vmatpush.msra.mxu0 %v1785
      %v1787 = vand.u32 %v1628, 4294901760
      %v1788 = vsub.f32 %v1628, %v1787
      %1789 = vmatpush.msra.mxu0 %v1788
      %v1790 = vand.u32 %v1627, 4294901760
      %v1791 = vsub.f32 %v1627, %v1790
      %1792 = vmatpush.msra.mxu0 %v1791
      %v1793 = vand.u32 %v1626, 4294901760
      %v1794 = vsub.f32 %v1626, %v1793
      %1795 = vmatpush.msra.mxu0 %v1794
      %v1796 = vand.u32 %v1625, 4294901760
      %v1797 = vsub.f32 %v1625, %v1796
      %1798 = vmatpush.msra.mxu0 %v1797
      %v1799 = vand.u32 %v1624, 4294901760
      %v1800 = vsub.f32 %v1624, %v1799
      %1801 = vmatpush.msra.mxu0 %v1800
      %v1802 = vand.u32 %v1623, 4294901760
      %v1803 = vsub.f32 %v1623, %v1802
      %1804 = vmatpush.msra.mxu0 %v1803
      %v1805 = vand.u32 %v1622, 4294901760
      %v1806 = vsub.f32 %v1622, %v1805
      %1807 = vmatpush.msra.mxu0 %v1806
      %v1808 = vand.u32 %v1621, 4294901760
      %v1809 = vsub.f32 %v1621, %v1808
      %1810 = vmatpush.msra.mxu0 %v1809
      %v1811 = vand.u32 %v1620, 4294901760
      %v1812 = vsub.f32 %v1620, %v1811
      %1813 = vmatpush.msra.mxu0 %v1812
      %v1814 = vand.u32 %v1619, 4294901760
      %v1815 = vsub.f32 %v1619, %v1814
      %1816 = vmatpush.msra.mxu0 %v1815
      %v1817 = vand.u32 %v1618, 4294901760
      %v1818 = vsub.f32 %v1618, %v1817
      %1819 = vmatpush.msra.mxu0 %v1818
      %v1820 = vand.u32 %v1617, 4294901760
      %v1821 = vsub.f32 %v1617, %v1820
      %1822 = vmatpush.msra.mxu0 %v1821
      %v1823 = vand.u32 %v1615, 4294901760
      %v1824 = vsub.f32 %v1615, %v1823
      %1825 = vmatmul.f32.gmra.mxu0 %v1824
      %v1826 = vpop.f32.mrf.mxu0
      %v1827 = vadd.f32 %v1773, %v1826
      %1828 = vdwg.mxu0
      %v1829 = vand.u32 %v1632, 4294901760
      %1830 = vmatpush.msra.mxu0 %v1829
      %v1831 = vand.u32 %v1631, 4294901760
      %1832 = vmatpush.msra.mxu0 %v1831
      %v1833 = vand.u32 %v1630, 4294901760
      %1834 = vmatpush.msra.mxu0 %v1833
      %v1835 = vand.u32 %v1629, 4294901760
      %1836 = vmatpush.msra.mxu0 %v1835
      %v1837 = vand.u32 %v1628, 4294901760
      %1838 = vmatpush.msra.mxu0 %v1837
      %v1839 = vand.u32 %v1627, 4294901760
      %1840 = vmatpush.msra.mxu0 %v1839
      %v1841 = vand.u32 %v1626, 4294901760
      %1842 = vmatpush.msra.mxu0 %v1841
      %v1843 = vand.u32 %v1625, 4294901760
      %1844 = vmatpush.msra.mxu0 %v1843
      %v1845 = vand.u32 %v1624, 4294901760
      %1846 = vmatpush.msra.mxu0 %v1845
      %v1847 = vand.u32 %v1623, 4294901760
      %1848 = vmatpush.msra.mxu0 %v1847
      %v1849 = vand.u32 %v1622, 4294901760
      %1850 = vmatpush.msra.mxu0 %v1849
      %v1851 = vand.u32 %v1621, 4294901760
      %1852 = vmatpush.msra.mxu0 %v1851
      %v1853 = vand.u32 %v1620, 4294901760
      %1854 = vmatpush.msra.mxu0 %v1853
      %v1855 = vand.u32 %v1619, 4294901760
      %1856 = vmatpush.msra.mxu0 %v1855
      %v1857 = vand.u32 %v1618, 4294901760
      %1858 = vmatpush.msra.mxu0 %v1857
      %v1859 = vand.u32 %v1617, 4294901760
      %1860 = vmatpush.msra.mxu0 %v1859
      %v1861 = vand.u32 %v1615, 4294901760
      %v1862 = vsub.f32 %v1615, %v1861
      %v1863 = vand.u32 %v1862, 4294901760
      %1864 = vmatmul.f32.gmra.mxu0 %v1863
      %v1865 = vpop.f32.mrf.mxu0
      %v1866 = vadd.f32 %v1827, %v1865
      %1867 = vdwg.mxu0
      %v1868 = vand.u32 %v1632, 4294901760
      %v1869 = vsub.f32 %v1632, %v1868
      %v1870 = vand.u32 %v1869, 4294901760
      %1871 = vmatpush.msra.mxu0 %v1870
      %v1872 = vand.u32 %v1631, 4294901760
      %v1873 = vsub.f32 %v1631, %v1872
      %v1874 = vand.u32 %v1873, 4294901760
      %1875 = vmatpush.msra.mxu0 %v1874
      %v1876 = vand.u32 %v1630, 4294901760
      %v1877 = vsub.f32 %v1630, %v1876
      %v1878 = vand.u32 %v1877, 4294901760
      %1879 = vmatpush.msra.mxu0 %v1878
      %v1880 = vand.u32 %v1629, 4294901760
      %v1881 = vsub.f32 %v1629, %v1880
      %v1882 = vand.u32 %v1881, 4294901760
      %1883 = vmatpush.msra.mxu0 %v1882
      %v1884 = vand.u32 %v1628, 4294901760
      %v1885 = vsub.f32 %v1628, %v1884
      %v1886 = vand.u32 %v1885, 4294901760
      %1887 = vmatpush.msra.mxu0 %v1886
      %v1888 = vand.u32 %v1627, 4294901760
      %v1889 = vsub.f32 %v1627, %v1888
      %v1890 = vand.u32 %v1889, 4294901760
      %1891 = vmatpush.msra.mxu0 %v1890
      %v1892 = vand.u32 %v1626, 4294901760
      %v1893 = vsub.f32 %v1626, %v1892
      %v1894 = vand.u32 %v1893, 4294901760
      %1895 = vmatpush.msra.mxu0 %v1894
      %v1896 = vand.u32 %v1625, 4294901760
      %v1897 = vsub.f32 %v1625, %v1896
      %v1898 = vand.u32 %v1897, 4294901760
      %1899 = vmatpush.msra.mxu0 %v1898
      %v1900 = vand.u32 %v1624, 4294901760
      %v1901 = vsub.f32 %v1624, %v1900
      %v1902 = vand.u32 %v1901, 4294901760
      %1903 = vmatpush.msra.mxu0 %v1902
      %v1904 = vand.u32 %v1623, 4294901760
      %v1905 = vsub.f32 %v1623, %v1904
      %v1906 = vand.u32 %v1905, 4294901760
      %1907 = vmatpush.msra.mxu0 %v1906
      %v1908 = vand.u32 %v1622, 4294901760
      %v1909 = vsub.f32 %v1622, %v1908
      %v1910 = vand.u32 %v1909, 4294901760
      %1911 = vmatpush.msra.mxu0 %v1910
      %v1912 = vand.u32 %v1621, 4294901760
      %v1913 = vsub.f32 %v1621, %v1912
      %v1914 = vand.u32 %v1913, 4294901760
      %1915 = vmatpush.msra.mxu0 %v1914
      %v1916 = vand.u32 %v1620, 4294901760
      %v1917 = vsub.f32 %v1620, %v1916
      %v1918 = vand.u32 %v1917, 4294901760
      %1919 = vmatpush.msra.mxu0 %v1918
      %v1920 = vand.u32 %v1619, 4294901760
      %v1921 = vsub.f32 %v1619, %v1920
      %v1922 = vand.u32 %v1921, 4294901760
      %1923 = vmatpush.msra.mxu0 %v1922
      %v1924 = vand.u32 %v1618, 4294901760
      %v1925 = vsub.f32 %v1618, %v1924
      %v1926 = vand.u32 %v1925, 4294901760
      %1927 = vmatpush.msra.mxu0 %v1926
      %v1928 = vand.u32 %v1617, 4294901760
      %v1929 = vsub.f32 %v1617, %v1928
      %v1930 = vand.u32 %v1929, 4294901760
      %1931 = vmatpush.msra.mxu0 %v1930
      %v1932 = vand.u32 %v1615, 4294901760
      %1933 = vmatmul.f32.gmra.mxu0 %v1932
      %v1934 = vpop.f32.mrf.mxu0
      %v1935 = vadd.f32 %v1866, %v1934
      %1936 = vdwg.mxu0
      %v1937 = vand.u32 %v1632, 4294901760
      %1938 = vmatpush.msra.mxu0 %v1937
      %v1939 = vand.u32 %v1631, 4294901760
      %1940 = vmatpush.msra.mxu0 %v1939
      %v1941 = vand.u32 %v1630, 4294901760
      %1942 = vmatpush.msra.mxu0 %v1941
      %v1943 = vand.u32 %v1629, 4294901760
      %1944 = vmatpush.msra.mxu0 %v1943
      %v1945 = vand.u32 %v1628, 4294901760
      %1946 = vmatpush.msra.mxu0 %v1945
      %v1947 = vand.u32 %v1627, 4294901760
      %1948 = vmatpush.msra.mxu0 %v1947
      %v1949 = vand.u32 %v1626, 4294901760
      %1950 = vmatpush.msra.mxu0 %v1949
      %v1951 = vand.u32 %v1625, 4294901760
      %1952 = vmatpush.msra.mxu0 %v1951
      %v1953 = vand.u32 %v1624, 4294901760
      %1954 = vmatpush.msra.mxu0 %v1953
      %v1955 = vand.u32 %v1623, 4294901760
      %1956 = vmatpush.msra.mxu0 %v1955
      %v1957 = vand.u32 %v1622, 4294901760
      %1958 = vmatpush.msra.mxu0 %v1957
      %v1959 = vand.u32 %v1621, 4294901760
      %1960 = vmatpush.msra.mxu0 %v1959
      %v1961 = vand.u32 %v1620, 4294901760
      %1962 = vmatpush.msra.mxu0 %v1961
      %v1963 = vand.u32 %v1619, 4294901760
      %1964 = vmatpush.msra.mxu0 %v1963
      %v1965 = vand.u32 %v1618, 4294901760
      %1966 = vmatpush.msra.mxu0 %v1965
      %v1967 = vand.u32 %v1617, 4294901760
      %1968 = vmatpush.msra.mxu0 %v1967
      %v1969 = vand.u32 %v1615, 4294901760
      %1970 = vmatmul.f32.gmra.mxu0 %v1969
      %v1971 = vpop.f32.mrf.mxu0
      %v1972 = vadd.f32 %v1935, %v1971
      %1973 = vdwg.mxu0
      %v1974 = vmul.f32 %v1615, %v1615
      %v1975 = vand.u32 %v1632, 4294901760
      %1976 = vmatpush.msra.mxu0 %v1975
      %v1977 = vand.u32 %v1631, 4294901760
      %1978 = vmatpush.msra.mxu0 %v1977
      %v1979 = vand.u32 %v1630, 4294901760
      %1980 = vmatpush.msra.mxu0 %v1979
      %v1981 = vand.u32 %v1629, 4294901760
      %1982 = vmatpush.msra.mxu0 %v1981
      %v1983 = vand.u32 %v1628, 4294901760
      %1984 = vmatpush.msra.mxu0 %v1983
      %v1985 = vand.u32 %v1627, 4294901760
      %1986 = vmatpush.msra.mxu0 %v1985
      %v1987 = vand.u32 %v1626, 4294901760
      %1988 = vmatpush.msra.mxu0 %v1987
      %v1989 = vand.u32 %v1625, 4294901760
      %1990 = vmatpush.msra.mxu0 %v1989
      %v1991 = vand.u32 %v1624, 4294901760
      %1992 = vmatpush.msra.mxu0 %v1991
      %v1993 = vand.u32 %v1623, 4294901760
      %1994 = vmatpush.msra.mxu0 %v1993
      %v1995 = vand.u32 %v1622, 4294901760
      %1996 = vmatpush.msra.mxu0 %v1995
      %v1997 = vand.u32 %v1621, 4294901760
      %1998 = vmatpush.msra.mxu0 %v1997
      %v1999 = vand.u32 %v1620, 4294901760
      %2000 = vmatpush.msra.mxu0 %v1999
      %v2001 = vand.u32 %v1619, 4294901760
      %2002 = vmatpush.msra.mxu0 %v2001
      %v2003 = vand.u32 %v1618, 4294901760
      %2004 = vmatpush.msra.mxu0 %v2003
      %v2005 = vand.u32 %v1617, 4294901760
      %2006 = vmatpush.msra.mxu0 %v2005
      %v2007 = vand.u32 %v1974, 4294901760
      %v2008 = vsub.f32 %v1974, %v2007
      %v2009 = vand.u32 %v2008, 4294901760
      %v2010 = vsub.f32 %v2008, %v2009
      %v2011 = vand.u32 %v2010, 4294901760
      %2012 = vmatmul.f32.gmra.mxu0 %v2011
      %v2013 = vpop.f32.mrf.mxu0
      %v2014 = vadd.f32 0.0, %v2013
      %2015 = vdwg.mxu0
      %v2016 = vand.u32 %v1632, 4294901760
      %v2017 = vsub.f32 %v1632, %v2016
      %v2018 = vand.u32 %v2017, 4294901760
      %v2019 = vsub.f32 %v2017, %v2018
      %v2020 = vand.u32 %v2019, 4294901760
      %2021 = vmatpush.msra.mxu0 %v2020
      %v2022 = vand.u32 %v1631, 4294901760
      %v2023 = vsub.f32 %v1631, %v2022
      %v2024 = vand.u32 %v2023, 4294901760
      %v2025 = vsub.f32 %v2023, %v2024
      %v2026 = vand.u32 %v2025, 4294901760
      %2027 = vmatpush.msra.mxu0 %v2026
      %v2028 = vand.u32 %v1630, 4294901760
      %v2029 = vsub.f32 %v1630, %v2028
      %v2030 = vand.u32 %v2029, 4294901760
      %v2031 = vsub.f32 %v2029, %v2030
      %v2032 = vand.u32 %v2031, 4294901760
      %2033 = vmatpush.msra.mxu0 %v2032
      %v2034 = vand.u32 %v1629, 4294901760
      %v2035 = vsub.f32 %v1629, %v2034
      %v2036 = vand.u32 %v2035, 4294901760
      %v2037 = vsub.f32 %v2035, %v2036
      %v2038 = vand.u32 %v2037, 4294901760
      %2039 = vmatpush.msra.mxu0 %v2038
      %v2040 = vand.u32 %v1628, 4294901760
      %v2041 = vsub.f32 %v1628, %v2040
      %v2042 = vand.u32 %v2041, 4294901760
      %v2043 = vsub.f32 %v2041, %v2042
      %v2044 = vand.u32 %v2043, 4294901760
      %2045 = vmatpush.msra.mxu0 %v2044
      %v2046 = vand.u32 %v1627, 4294901760
      %v2047 = vsub.f32 %v1627, %v2046
      %v2048 = vand.u32 %v2047, 4294901760
      %v2049 = vsub.f32 %v2047, %v2048
      %v2050 = vand.u32 %v2049, 4294901760
      %2051 = vmatpush.msra.mxu0 %v2050
      %v2052 = vand.u32 %v1626, 4294901760
      %v2053 = vsub.f32 %v1626, %v2052
      %v2054 = vand.u32 %v2053, 4294901760
      %v2055 = vsub.f32 %v2053, %v2054
      %v2056 = vand.u32 %v2055, 4294901760
      %2057 = vmatpush.msra.mxu0 %v2056
      %v2058 = vand.u32 %v1625, 4294901760
      %v2059 = vsub.f32 %v1625, %v2058
      %v2060 = vand.u32 %v2059, 4294901760
      %v2061 = vsub.f32 %v2059, %v2060
      %v2062 = vand.u32 %v2061, 4294901760
      %2063 = vmatpush.msra.mxu0 %v2062
      %v2064 = vand.u32 %v1624, 4294901760
      %v2065 = vsub.f32 %v1624, %v2064
      %v2066 = vand.u32 %v2065, 4294901760
      %v2067 = vsub.f32 %v2065, %v2066
      %v2068 = vand.u32 %v2067, 4294901760
      %2069 = vmatpush.msra.mxu0 %v2068
      %v2070 = vand.u32 %v1623, 4294901760
      %v2071 = vsub.f32 %v1623, %v2070
      %v2072 = vand.u32 %v2071, 4294901760
      %v2073 = vsub.f32 %v2071, %v2072
      %v2074 = vand.u32 %v2073, 4294901760
      %2075 = vmatpush.msra.mxu0 %v2074
      %v2076 = vand.u32 %v1622, 4294901760
      %v2077 = vsub.f32 %v1622, %v2076
      %v2078 = vand.u32 %v2077, 4294901760
      %v2079 = vsub.f32 %v2077, %v2078
      %v2080 = vand.u32 %v2079, 4294901760
      %2081 = vmatpush.msra.mxu0 %v2080
      %v2082 = vand.u32 %v1621, 4294901760
      %v2083 = vsub.f32 %v1621, %v2082
      %v2084 = vand.u32 %v2083, 4294901760
      %v2085 = vsub.f32 %v2083, %v2084
      %v2086 = vand.u32 %v2085, 4294901760
      %2087 = vmatpush.msra.mxu0 %v2086
      %v2088 = vand.u32 %v1620, 4294901760
      %v2089 = vsub.f32 %v1620, %v2088
      %v2090 = vand.u32 %v2089, 4294901760
      %v2091 = vsub.f32 %v2089, %v2090
      %v2092 = vand.u32 %v2091, 4294901760
      %2093 = vmatpush.msra.mxu0 %v2092
      %v2094 = vand.u32 %v1619, 4294901760
      %v2095 = vsub.f32 %v1619, %v2094
      %v2096 = vand.u32 %v2095, 4294901760
      %v2097 = vsub.f32 %v2095, %v2096
      %v2098 = vand.u32 %v2097, 4294901760
      %2099 = vmatpush.msra.mxu0 %v2098
      %v2100 = vand.u32 %v1618, 4294901760
      %v2101 = vsub.f32 %v1618, %v2100
      %v2102 = vand.u32 %v2101, 4294901760
      %v2103 = vsub.f32 %v2101, %v2102
      %v2104 = vand.u32 %v2103, 4294901760
      %2105 = vmatpush.msra.mxu0 %v2104
      %v2106 = vand.u32 %v1617, 4294901760
      %v2107 = vsub.f32 %v1617, %v2106
      %v2108 = vand.u32 %v2107, 4294901760
      %v2109 = vsub.f32 %v2107, %v2108
      %v2110 = vand.u32 %v2109, 4294901760
      %2111 = vmatpush.msra.mxu0 %v2110
      %v2112 = vand.u32 %v1974, 4294901760
      %2113 = vmatmul.f32.gmra.mxu0 %v2112
      %v2114 = vpop.f32.mrf.mxu0
      %v2115 = vadd.f32 %v2014, %v2114
      %2116 = vdwg.mxu0
      %v2117 = vand.u32 %v1632, 4294901760
      %v2118 = vsub.f32 %v1632, %v2117
      %2119 = vmatpush.msra.mxu0 %v2118
      %v2120 = vand.u32 %v1631, 4294901760
      %v2121 = vsub.f32 %v1631, %v2120
      %2122 = vmatpush.msra.mxu0 %v2121
      %v2123 = vand.u32 %v1630, 4294901760
      %v2124 = vsub.f32 %v1630, %v2123
      %2125 = vmatpush.msra.mxu0 %v2124
      %v2126 = vand.u32 %v1629, 4294901760
      %v2127 = vsub.f32 %v1629, %v2126
      %2128 = vmatpush.msra.mxu0 %v2127
      %v2129 = vand.u32 %v1628, 4294901760
      %v2130 = vsub.f32 %v1628, %v2129
      %2131 = vmatpush.msra.mxu0 %v2130
      %v2132 = vand.u32 %v1627, 4294901760
      %v2133 = vsub.f32 %v1627, %v2132
      %2134 = vmatpush.msra.mxu0 %v2133
      %v2135 = vand.u32 %v1626, 4294901760
      %v2136 = vsub.f32 %v1626, %v2135
      %2137 = vmatpush.msra.mxu0 %v2136
      %v2138 = vand.u32 %v1625, 4294901760
      %v2139 = vsub.f32 %v1625, %v2138
      %2140 = vmatpush.msra.mxu0 %v2139
      %v2141 = vand.u32 %v1624, 4294901760
      %v2142 = vsub.f32 %v1624, %v2141
      %2143 = vmatpush.msra.mxu0 %v2142
      %v2144 = vand.u32 %v1623, 4294901760
      %v2145 = vsub.f32 %v1623, %v2144
      %2146 = vmatpush.msra.mxu0 %v2145
      %v2147 = vand.u32 %v1622, 4294901760
      %v2148 = vsub.f32 %v1622, %v2147
      %2149 = vmatpush.msra.mxu0 %v2148
      %v2150 = vand.u32 %v1621, 4294901760
      %v2151 = vsub.f32 %v1621, %v2150
      %2152 = vmatpush.msra.mxu0 %v2151
      %v2153 = vand.u32 %v1620, 4294901760
      %v2154 = vsub.f32 %v1620, %v2153
      %2155 = vmatpush.msra.mxu0 %v2154
      %v2156 = vand.u32 %v1619, 4294901760
      %v2157 = vsub.f32 %v1619, %v2156
      %2158 = vmatpush.msra.mxu0 %v2157
      %v2159 = vand.u32 %v1618, 4294901760
      %v2160 = vsub.f32 %v1618, %v2159
      %2161 = vmatpush.msra.mxu0 %v2160
      %v2162 = vand.u32 %v1617, 4294901760
      %v2163 = vsub.f32 %v1617, %v2162
      %2164 = vmatpush.msra.mxu0 %v2163
      %v2165 = vand.u32 %v1974, 4294901760
      %v2166 = vsub.f32 %v1974, %v2165
      %2167 = vmatmul.f32.gmra.mxu0 %v2166
      %v2168 = vpop.f32.mrf.mxu0
      %v2169 = vadd.f32 %v2115, %v2168
      %2170 = vdwg.mxu0
      %v2171 = vand.u32 %v1632, 4294901760
      %2172 = vmatpush.msra.mxu0 %v2171
      %v2173 = vand.u32 %v1631, 4294901760
      %2174 = vmatpush.msra.mxu0 %v2173
      %v2175 = vand.u32 %v1630, 4294901760
      %2176 = vmatpush.msra.mxu0 %v2175
      %v2177 = vand.u32 %v1629, 4294901760
      %2178 = vmatpush.msra.mxu0 %v2177
      %v2179 = vand.u32 %v1628, 4294901760
      %2180 = vmatpush.msra.mxu0 %v2179
      %v2181 = vand.u32 %v1627, 4294901760
      %2182 = vmatpush.msra.mxu0 %v2181
      %v2183 = vand.u32 %v1626, 4294901760
      %2184 = vmatpush.msra.mxu0 %v2183
      %v2185 = vand.u32 %v1625, 4294901760
      %2186 = vmatpush.msra.mxu0 %v2185
      %v2187 = vand.u32 %v1624, 4294901760
      %2188 = vmatpush.msra.mxu0 %v2187
      %v2189 = vand.u32 %v1623, 4294901760
      %2190 = vmatpush.msra.mxu0 %v2189
      %v2191 = vand.u32 %v1622, 4294901760
      %2192 = vmatpush.msra.mxu0 %v2191
      %v2193 = vand.u32 %v1621, 4294901760
      %2194 = vmatpush.msra.mxu0 %v2193
      %v2195 = vand.u32 %v1620, 4294901760
      %2196 = vmatpush.msra.mxu0 %v2195
      %v2197 = vand.u32 %v1619, 4294901760
      %2198 = vmatpush.msra.mxu0 %v2197
      %v2199 = vand.u32 %v1618, 4294901760
      %2200 = vmatpush.msra.mxu0 %v2199
      %v2201 = vand.u32 %v1617, 4294901760
      %2202 = vmatpush.msra.mxu0 %v2201
      %v2203 = vand.u32 %v1974, 4294901760
      %v2204 = vsub.f32 %v1974, %v2203
      %v2205 = vand.u32 %v2204, 4294901760
      %2206 = vmatmul.f32.gmra.mxu0 %v2205
      %v2207 = vpop.f32.mrf.mxu0
      %v2208 = vadd.f32 %v2169, %v2207
      %2209 = vdwg.mxu0
      %v2210 = vand.u32 %v1632, 4294901760
      %v2211 = vsub.f32 %v1632, %v2210
      %v2212 = vand.u32 %v2211, 4294901760
      %2213 = vmatpush.msra.mxu0 %v2212
      %v2214 = vand.u32 %v1631, 4294901760
      %v2215 = vsub.f32 %v1631, %v2214
      %v2216 = vand.u32 %v2215, 4294901760
      %2217 = vmatpush.msra.mxu0 %v2216
      %v2218 = vand.u32 %v1630, 4294901760
      %v2219 = vsub.f32 %v1630, %v2218
      %v2220 = vand.u32 %v2219, 4294901760
      %2221 = vmatpush.msra.mxu0 %v2220
      %v2222 = vand.u32 %v1629, 4294901760
      %v2223 = vsub.f32 %v1629, %v2222
      %v2224 = vand.u32 %v2223, 4294901760
      %2225 = vmatpush.msra.mxu0 %v2224
      %v2226 = vand.u32 %v1628, 4294901760
      %v2227 = vsub.f32 %v1628, %v2226
      %v2228 = vand.u32 %v2227, 4294901760
      %2229 = vmatpush.msra.mxu0 %v2228
      %v2230 = vand.u32 %v1627, 4294901760
      %v2231 = vsub.f32 %v1627, %v2230
      %v2232 = vand.u32 %v2231, 4294901760
      %2233 = vmatpush.msra.mxu0 %v2232
      %v2234 = vand.u32 %v1626, 4294901760
      %v2235 = vsub.f32 %v1626, %v2234
      %v2236 = vand.u32 %v2235, 4294901760
      %2237 = vmatpush.msra.mxu0 %v2236
      %v2238 = vand.u32 %v1625, 4294901760
      %v2239 = vsub.f32 %v1625, %v2238
      %v2240 = vand.u32 %v2239, 4294901760
      %2241 = vmatpush.msra.mxu0 %v2240
      %v2242 = vand.u32 %v1624, 4294901760
      %v2243 = vsub.f32 %v1624, %v2242
      %v2244 = vand.u32 %v2243, 4294901760
      %2245 = vmatpush.msra.mxu0 %v2244
      %v2246 = vand.u32 %v1623, 4294901760
      %v2247 = vsub.f32 %v1623, %v2246
      %v2248 = vand.u32 %v2247, 4294901760
      %2249 = vmatpush.msra.mxu0 %v2248
      %v2250 = vand.u32 %v1622, 4294901760
      %v2251 = vsub.f32 %v1622, %v2250
      %v2252 = vand.u32 %v2251, 4294901760
      %2253 = vmatpush.msra.mxu0 %v2252
      %v2254 = vand.u32 %v1621, 4294901760
      %v2255 = vsub.f32 %v1621, %v2254
      %v2256 = vand.u32 %v2255, 4294901760
      %2257 = vmatpush.msra.mxu0 %v2256
      %v2258 = vand.u32 %v1620, 4294901760
      %v2259 = vsub.f32 %v1620, %v2258
      %v2260 = vand.u32 %v2259, 4294901760
      %2261 = vmatpush.msra.mxu0 %v2260
      %v2262 = vand.u32 %v1619, 4294901760
      %v2263 = vsub.f32 %v1619, %v2262
      %v2264 = vand.u32 %v2263, 4294901760
      %2265 = vmatpush.msra.mxu0 %v2264
      %v2266 = vand.u32 %v1618, 4294901760
      %v2267 = vsub.f32 %v1618, %v2266
      %v2268 = vand.u32 %v2267, 4294901760
      %2269 = vmatpush.msra.mxu0 %v2268
      %v2270 = vand.u32 %v1617, 4294901760
      %v2271 = vsub.f32 %v1617, %v2270
      %v2272 = vand.u32 %v2271, 4294901760
      %2273 = vmatpush.msra.mxu0 %v2272
      %v2274 = vand.u32 %v1974, 4294901760
      %2275 = vmatmul.f32.gmra.mxu0 %v2274
      %v2276 = vpop.f32.mrf.mxu0
      %v2277 = vadd.f32 %v2208, %v2276
      %2278 = vdwg.mxu0
      %v2279 = vand.u32 %v1632, 4294901760
      %2280 = vmatpush.msra.mxu0 %v2279
      %v2281 = vand.u32 %v1631, 4294901760
      %2282 = vmatpush.msra.mxu0 %v2281
      %v2283 = vand.u32 %v1630, 4294901760
      %2284 = vmatpush.msra.mxu0 %v2283
      %v2285 = vand.u32 %v1629, 4294901760
      %2286 = vmatpush.msra.mxu0 %v2285
      %v2287 = vand.u32 %v1628, 4294901760
      %2288 = vmatpush.msra.mxu0 %v2287
      %v2289 = vand.u32 %v1627, 4294901760
      %2290 = vmatpush.msra.mxu0 %v2289
      %v2291 = vand.u32 %v1626, 4294901760
      %2292 = vmatpush.msra.mxu0 %v2291
      %v2293 = vand.u32 %v1625, 4294901760
      %2294 = vmatpush.msra.mxu0 %v2293
      %v2295 = vand.u32 %v1624, 4294901760
      %2296 = vmatpush.msra.mxu0 %v2295
      %v2297 = vand.u32 %v1623, 4294901760
      %2298 = vmatpush.msra.mxu0 %v2297
      %v2299 = vand.u32 %v1622, 4294901760
      %2300 = vmatpush.msra.mxu0 %v2299
      %v2301 = vand.u32 %v1621, 4294901760
      %2302 = vmatpush.msra.mxu0 %v2301
      %v2303 = vand.u32 %v1620, 4294901760
      %2304 = vmatpush.msra.mxu0 %v2303
      %v2305 = vand.u32 %v1619, 4294901760
      %2306 = vmatpush.msra.mxu0 %v2305
      %v2307 = vand.u32 %v1618, 4294901760
      %2308 = vmatpush.msra.mxu0 %v2307
      %v2309 = vand.u32 %v1617, 4294901760
      %2310 = vmatpush.msra.mxu0 %v2309
      %v2311 = vand.u32 %v1974, 4294901760
      %2312 = vmatmul.f32.gmra.mxu0 %v2311
      %v2313 = vpop.f32.mrf.mxu0
      %v2314 = vadd.f32 %v2277, %v2313
      %2315 = vdwg.mxu0
      %v2316 = vmul.f32 %v1972, 0.03125
      %v2317 = vmul.f32 %v2314, 0.03125
      %v2318 = vmul.f32 %v2316, %v2316
      %v2319 = vsub.f32 %v2317, %v2318
      %v2320 = vsub.f32 %v1615, %v2316
      %v2321 = vadd.f32 %v2319, 1e-05
      %v2322 = vrsqrt.pop %v2321
      %v2323 = vmul.f32 %v2322, %v2321
      %v2324 = vmul.f32 %v2323, %v2322
      %v2325 = vmul.f32 0.5, %v2324
      %v2326 = vsub.f32 1.5, %v2325
      %v2327 = vmul.f32 %v2322, %v2326
      %vm2328 = vweird.f32 %v2321
      %vm2329 = vweird.f32 %v2322
      %vm2330 = vmor %vm2328, %vm2329
      %v2331 = vsel %vm2330, %v2322, %v2327
      %v2332 = vmul.f32 %v2320, %v2331
      %s2333 = scalar_lea.vmem [#allocation11], %s1270
      %v2334 = vld [vmem:[%s2333] sm:$0x1]
      %v2336 = vperm.slane %v2334, 0
      %v2338 = vmul.f32 %v2332, %v2336
      %s2339 = scalar_lea.vmem [#allocation13], %s1270
      %v2340 = vld [vmem:[%s2339] sm:$0x1]
      %v2342 = vperm.slane %v2340, 0
      %v2344 = vadd.f32 %v2338, %v2342
      %v2345 = vtanh.pop %v2344
    $region74: #{tpu_custom_call.1} parent=1 // loop_footer
      %s1250 = sadd.s32 1, %s1246
    $region75: #{tpu_custom_call.1} parent=1 // loop_footer_branch
      %1245 = sbr.rel target = $region71
    $region76: #{tpu_custom_call.1} parent=1 // loop_exit
      _
    %v2346 = vld [vmem:[#allocation8] sm:$0xff]
    %v2347 = vld [vmem:[#allocation8 + $0x8] sm:$0xff]
    %v2348 = vld [vmem:[#allocation8 + $0x10] sm:$0xff]
    %v2349 = vld [vmem:[#allocation8 + $0x18] sm:$0xff]
    %v2350 = vld [vmem:[#allocation8 + $0x20] sm:$0xff]
    %v2351 = vld [vmem:[#allocation8 + $0x28] sm:$0xff]
    %v2352 = vld [vmem:[#allocation8 + $0x30] sm:$0xff]
    %v2353 = vld [vmem:[#allocation8 + $0x38] sm:$0xff]
    %v2354 = vld [vmem:[#allocation8 + $0x40] sm:$0xff]
    %v2355 = vld [vmem:[#allocation8 + $0x48] sm:$0xff]
    %v2356 = vld [vmem:[#allocation8 + $0x50] sm:$0xff]
    %v2357 = vld [vmem:[#allocation8 + $0x58] sm:$0xff]
    %v2358 = vld [vmem:[#allocation8 + $0x60] sm:$0xff]
    %v2359 = vld [vmem:[#allocation8 + $0x68] sm:$0xff]
    %v2360 = vld [vmem:[#allocation8 + $0x70] sm:$0xff]
    %v2361 = vld [vmem:[#allocation8 + $0x78] sm:$0xff]
    %v2362 = vld [vmem:[%s7] sm:$0x1]
    %v2364 = vperm.slane %v2362, 0
    %v2366 = vand.u32 %v2361, 4294901760
    %2367 = vmatpush.msra.mxu0 %v2366
    %v2368 = vand.u32 %v2360, 4294901760
    %2369 = vmatpush.msra.mxu0 %v2368
    %v2370 = vand.u32 %v2359, 4294901760
    %2371 = vmatpush.msra.mxu0 %v2370
    %v2372 = vand.u32 %v2358, 4294901760
    %2373 = vmatpush.msra.mxu0 %v2372
    %v2374 = vand.u32 %v2357, 4294901760
    %2375 = vmatpush.msra.mxu0 %v2374
    %v2376 = vand.u32 %v2356, 4294901760
    %2377 = vmatpush.msra.mxu0 %v2376
    %v2378 = vand.u32 %v2355, 4294901760
    %2379 = vmatpush.msra.mxu0 %v2378
    %v2380 = vand.u32 %v2354, 4294901760
    %2381 = vmatpush.msra.mxu0 %v2380
    %v2382 = vand.u32 %v2353, 4294901760
    %2383 = vmatpush.msra.mxu0 %v2382
    %v2384 = vand.u32 %v2352, 4294901760
    %2385 = vmatpush.msra.mxu0 %v2384
    %v2386 = vand.u32 %v2351, 4294901760
    %2387 = vmatpush.msra.mxu0 %v2386
    %v2388 = vand.u32 %v2350, 4294901760
    %2389 = vmatpush.msra.mxu0 %v2388
    %v2390 = vand.u32 %v2349, 4294901760
    %2391 = vmatpush.msra.mxu0 %v2390
    %v2392 = vand.u32 %v2348, 4294901760
    %2393 = vmatpush.msra.mxu0 %v2392
    %v2394 = vand.u32 %v2347, 4294901760
    %2395 = vmatpush.msra.mxu0 %v2394
    %v2396 = vand.u32 %v2346, 4294901760
    %2397 = vmatpush.msra.mxu0 %v2396
    %v2398 = vand.u32 %v1251, 4294901760
    %v2399 = vsub.f32 %v1251, %v2398
    %v2400 = vand.u32 %v2399, 4294901760
    %v2401 = vsub.f32 %v2399, %v2400
    %v2402 = vand.u32 %v2401, 4294901760
    %2403 = vmatmul.f32.gmra.mxu0 %v2402
    %v2404 = vpop.f32.mrf.mxu0
    %v2405 = vadd.f32 %v2364, %v2404
    %2406 = vdwg.mxu0
    %v2407 = vand.u32 %v2361, 4294901760
    %v2408 = vsub.f32 %v2361, %v2407
    %v2409 = vand.u32 %v2408, 4294901760
    %v2410 = vsub.f32 %v2408, %v2409
    %v2411 = vand.u32 %v2410, 4294901760
    %2412 = vmatpush.msra.mxu0 %v2411
    %v2413 = vand.u32 %v2360, 4294901760
    %v2414 = vsub.f32 %v2360, %v2413
    %v2415 = vand.u32 %v2414, 4294901760
    %v2416 = vsub.f32 %v2414, %v2415
    %v2417 = vand.u32 %v2416, 4294901760
    %2418 = vmatpush.msra.mxu0 %v2417
    %v2419 = vand.u32 %v2359, 4294901760
    %v2420 = vsub.f32 %v2359, %v2419
    %v2421 = vand.u32 %v2420, 4294901760
    %v2422 = vsub.f32 %v2420, %v2421
    %v2423 = vand.u32 %v2422, 4294901760
    %2424 = vmatpush.msra.mxu0 %v2423
    %v2425 = vand.u32 %v2358, 4294901760
    %v2426 = vsub.f32 %v2358, %v2425
    %v2427 = vand.u32 %v2426, 4294901760
    %v2428 = vsub.f32 %v2426, %v2427
    %v2429 = vand.u32 %v2428, 4294901760
    %2430 = vmatpush.msra.mxu0 %v2429
    %v2431 = vand.u32 %v2357, 4294901760
    %v2432 = vsub.f32 %v2357, %v2431
    %v2433 = vand.u32 %v2432, 4294901760
    %v2434 = vsub.f32 %v2432, %v2433
    %v2435 = vand.u32 %v2434, 4294901760
    %2436 = vmatpush.msra.mxu0 %v2435
    %v2437 = vand.u32 %v2356, 4294901760
    %v2438 = vsub.f32 %v2356, %v2437
    %v2439 = vand.u32 %v2438, 4294901760
    %v2440 = vsub.f32 %v2438, %v2439
    %v2441 = vand.u32 %v2440, 4294901760
    %2442 = vmatpush.msra.mxu0 %v2441
    %v2443 = vand.u32 %v2355, 4294901760
    %v2444 = vsub.f32 %v2355, %v2443
    %v2445 = vand.u32 %v2444, 4294901760
    %v2446 = vsub.f32 %v2444, %v2445
    %v2447 = vand.u32 %v2446, 4294901760
    %2448 = vmatpush.msra.mxu0 %v2447
    %v2449 = vand.u32 %v2354, 4294901760
    %v2450 = vsub.f32 %v2354, %v2449
    %v2451 = vand.u32 %v2450, 4294901760
    %v2452 = vsub.f32 %v2450, %v2451
    %v2453 = vand.u32 %v2452, 4294901760
    %2454 = vmatpush.msra.mxu0 %v2453
    %v2455 = vand.u32 %v2353, 4294901760
    %v2456 = vsub.f32 %v2353, %v2455
    %v2457 = vand.u32 %v2456, 4294901760
    %v2458 = vsub.f32 %v2456, %v2457
    %v2459 = vand.u32 %v2458, 4294901760
    %2460 = vmatpush.msra.mxu0 %v2459
    %v2461 = vand.u32 %v2352, 4294901760
    %v2462 = vsub.f32 %v2352, %v2461
    %v2463 = vand.u32 %v2462, 4294901760
    %v2464 = vsub.f32 %v2462, %v2463
    %v2465 = vand.u32 %v2464, 4294901760
    %2466 = vmatpush.msra.mxu0 %v2465
    %v2467 = vand.u32 %v2351, 4294901760
    %v2468 = vsub.f32 %v2351, %v2467
    %v2469 = vand.u32 %v2468, 4294901760
    %v2470 = vsub.f32 %v2468, %v2469
    %v2471 = vand.u32 %v2470, 4294901760
    %2472 = vmatpush.msra.mxu0 %v2471
    %v2473 = vand.u32 %v2350, 4294901760
    %v2474 = vsub.f32 %v2350, %v2473
    %v2475 = vand.u32 %v2474, 4294901760
    %v2476 = vsub.f32 %v2474, %v2475
    %v2477 = vand.u32 %v2476, 4294901760
    %2478 = vmatpush.msra.mxu0 %v2477
    %v2479 = vand.u32 %v2349, 4294901760
    %v2480 = vsub.f32 %v2349, %v2479
    %v2481 = vand.u32 %v2480, 4294901760
    %v2482 = vsub.f32 %v2480, %v2481
    %v2483 = vand.u32 %v2482, 4294901760
    %2484 = vmatpush.msra.mxu0 %v2483
    %v2485 = vand.u32 %v2348, 4294901760
    %v2486 = vsub.f32 %v2348, %v2485
    %v2487 = vand.u32 %v2486, 4294901760
    %v2488 = vsub.f32 %v2486, %v2487
    %v2489 = vand.u32 %v2488, 4294901760
    %2490 = vmatpush.msra.mxu0 %v2489
    %v2491 = vand.u32 %v2347, 4294901760
    %v2492 = vsub.f32 %v2347, %v2491
    %v2493 = vand.u32 %v2492, 4294901760
    %v2494 = vsub.f32 %v2492, %v2493
    %v2495 = vand.u32 %v2494, 4294901760
    %2496 = vmatpush.msra.mxu0 %v2495
    %v2497 = vand.u32 %v2346, 4294901760
    %v2498 = vsub.f32 %v2346, %v2497
    %v2499 = vand.u32 %v2498, 4294901760
    %v2500 = vsub.f32 %v2498, %v2499
    %v2501 = vand.u32 %v2500, 4294901760
    %2502 = vmatpush.msra.mxu0 %v2501
    %v2503 = vand.u32 %v1251, 4294901760
    %2504 = vmatmul.f32.gmra.mxu0 %v2503
    %v2505 = vpop.f32.mrf.mxu0
    %v2506 = vadd.f32 %v2405, %v2505
    %2507 = vdwg.mxu0
    %v2508 = vand.u32 %v2361, 4294901760
    %v2509 = vsub.f32 %v2361, %v2508
    %2510 = vmatpush.msra.mxu0 %v2509
    %v2511 = vand.u32 %v2360, 4294901760
    %v2512 = vsub.f32 %v2360, %v2511
    %2513 = vmatpush.msra.mxu0 %v2512
    %v2514 = vand.u32 %v2359, 4294901760
    %v2515 = vsub.f32 %v2359, %v2514
    %2516 = vmatpush.msra.mxu0 %v2515
    %v2517 = vand.u32 %v2358, 4294901760
    %v2518 = vsub.f32 %v2358, %v2517
    %2519 = vmatpush.msra.mxu0 %v2518
    %v2520 = vand.u32 %v2357, 4294901760
    %v2521 = vsub.f32 %v2357, %v2520
    %2522 = vmatpush.msra.mxu0 %v2521
    %v2523 = vand.u32 %v2356, 4294901760
    %v2524 = vsub.f32 %v2356, %v2523
    %2525 = vmatpush.msra.mxu0 %v2524
    %v2526 = vand.u32 %v2355, 4294901760
    %v2527 = vsub.f32 %v2355, %v2526
    %2528 = vmatpush.msra.mxu0 %v2527
    %v2529 = vand.u32 %v2354, 4294901760
    %v2530 = vsub.f32 %v2354, %v2529
    %2531 = vmatpush.msra.mxu0 %v2530
    %v2532 = vand.u32 %v2353, 4294901760
    %v2533 = vsub.f32 %v2353, %v2532
    %2534 = vmatpush.msra.mxu0 %v2533
    %v2535 = vand.u32 %v2352, 4294901760
    %v2536 = vsub.f32 %v2352, %v2535
    %2537 = vmatpush.msra.mxu0 %v2536
    %v2538 = vand.u32 %v2351, 4294901760
    %v2539 = vsub.f32 %v2351, %v2538
    %2540 = vmatpush.msra.mxu0 %v2539
    %v2541 = vand.u32 %v2350, 4294901760
    %v2542 = vsub.f32 %v2350, %v2541
    %2543 = vmatpush.msra.mxu0 %v2542
    %v2544 = vand.u32 %v2349, 4294901760
    %v2545 = vsub.f32 %v2349, %v2544
    %2546 = vmatpush.msra.mxu0 %v2545
    %v2547 = vand.u32 %v2348, 4294901760
    %v2548 = vsub.f32 %v2348, %v2547
    %2549 = vmatpush.msra.mxu0 %v2548
    %v2550 = vand.u32 %v2347, 4294901760
    %v2551 = vsub.f32 %v2347, %v2550
    %2552 = vmatpush.msra.mxu0 %v2551
    %v2553 = vand.u32 %v2346, 4294901760
    %v2554 = vsub.f32 %v2346, %v2553
    %2555 = vmatpush.msra.mxu0 %v2554
    %v2556 = vand.u32 %v1251, 4294901760
    %v2557 = vsub.f32 %v1251, %v2556
    %2558 = vmatmul.f32.gmra.mxu0 %v2557
    %v2559 = vpop.f32.mrf.mxu0
    %v2560 = vadd.f32 %v2506, %v2559
    %2561 = vdwg.mxu0
    %v2562 = vand.u32 %v2361, 4294901760
    %2563 = vmatpush.msra.mxu0 %v2562
    %v2564 = vand.u32 %v2360, 4294901760
    %2565 = vmatpush.msra.mxu0 %v2564
    %v2566 = vand.u32 %v2359, 4294901760
    %2567 = vmatpush.msra.mxu0 %v2566
    %v2568 = vand.u32 %v2358, 4294901760
    %2569 = vmatpush.msra.mxu0 %v2568
    %v2570 = vand.u32 %v2357, 4294901760
    %2571 = vmatpush.msra.mxu0 %v2570
    %v2572 = vand.u32 %v2356, 4294901760
    %2573 = vmatpush.msra.mxu0 %v2572
    %v2574 = vand.u32 %v2355, 4294901760
    %2575 = vmatpush.msra.mxu0 %v2574
    %v2576 = vand.u32 %v2354, 4294901760
    %2577 = vmatpush.msra.mxu0 %v2576
    %v2578 = vand.u32 %v2353, 4294901760
    %2579 = vmatpush.msra.mxu0 %v2578
    %v2580 = vand.u32 %v2352, 4294901760
    %2581 = vmatpush.msra.mxu0 %v2580
    %v2582 = vand.u32 %v2351, 4294901760
    %2583 = vmatpush.msra.mxu0 %v2582
    %v2584 = vand.u32 %v2350, 4294901760
    %2585 = vmatpush.msra.mxu0 %v2584
    %v2586 = vand.u32 %v2349, 4294901760
    %2587 = vmatpush.msra.mxu0 %v2586
    %v2588 = vand.u32 %v2348, 4294901760
    %2589 = vmatpush.msra.mxu0 %v2588
    %v2590 = vand.u32 %v2347, 4294901760
    %2591 = vmatpush.msra.mxu0 %v2590
    %v2592 = vand.u32 %v2346, 4294901760
    %2593 = vmatpush.msra.mxu0 %v2592
    %v2594 = vand.u32 %v1251, 4294901760
    %v2595 = vsub.f32 %v1251, %v2594
    %v2596 = vand.u32 %v2595, 4294901760
    %2597 = vmatmul.f32.gmra.mxu0 %v2596
    %v2598 = vpop.f32.mrf.mxu0
    %v2599 = vadd.f32 %v2560, %v2598
    %2600 = vdwg.mxu0
    %v2601 = vand.u32 %v2361, 4294901760
    %v2602 = vsub.f32 %v2361, %v2601
    %v2603 = vand.u32 %v2602, 4294901760
    %2604 = vmatpush.msra.mxu0 %v2603
    %v2605 = vand.u32 %v2360, 4294901760
    %v2606 = vsub.f32 %v2360, %v2605
    %v2607 = vand.u32 %v2606, 4294901760
    %2608 = vmatpush.msra.mxu0 %v2607
    %v2609 = vand.u32 %v2359, 4294901760
    %v2610 = vsub.f32 %v2359, %v2609
    %v2611 = vand.u32 %v2610, 4294901760
    %2612 = vmatpush.msra.mxu0 %v2611
    %v2613 = vand.u32 %v2358, 4294901760
    %v2614 = vsub.f32 %v2358, %v2613
    %v2615 = vand.u32 %v2614, 4294901760
    %2616 = vmatpush.msra.mxu0 %v2615
    %v2617 = vand.u32 %v2357, 4294901760
    %v2618 = vsub.f32 %v2357, %v2617
    %v2619 = vand.u32 %v2618, 4294901760
    %2620 = vmatpush.msra.mxu0 %v2619
    %v2621 = vand.u32 %v2356, 4294901760
    %v2622 = vsub.f32 %v2356, %v2621
    %v2623 = vand.u32 %v2622, 4294901760
    %2624 = vmatpush.msra.mxu0 %v2623
    %v2625 = vand.u32 %v2355, 4294901760
    %v2626 = vsub.f32 %v2355, %v2625
    %v2627 = vand.u32 %v2626, 4294901760
    %2628 = vmatpush.msra.mxu0 %v2627
    %v2629 = vand.u32 %v2354, 4294901760
    %v2630 = vsub.f32 %v2354, %v2629
    %v2631 = vand.u32 %v2630, 4294901760
    %2632 = vmatpush.msra.mxu0 %v2631
    %v2633 = vand.u32 %v2353, 4294901760
    %v2634 = vsub.f32 %v2353, %v2633
    %v2635 = vand.u32 %v2634, 4294901760
    %2636 = vmatpush.msra.mxu0 %v2635
    %v2637 = vand.u32 %v2352, 4294901760
    %v2638 = vsub.f32 %v2352, %v2637
    %v2639 = vand.u32 %v2638, 4294901760
    %2640 = vmatpush.msra.mxu0 %v2639
    %v2641 = vand.u32 %v2351, 4294901760
    %v2642 = vsub.f32 %v2351, %v2641
    %v2643 = vand.u32 %v2642, 4294901760
    %2644 = vmatpush.msra.mxu0 %v2643
    %v2645 = vand.u32 %v2350, 4294901760
    %v2646 = vsub.f32 %v2350, %v2645
    %v2647 = vand.u32 %v2646, 4294901760
    %2648 = vmatpush.msra.mxu0 %v2647
    %v2649 = vand.u32 %v2349, 4294901760
    %v2650 = vsub.f32 %v2349, %v2649
    %v2651 = vand.u32 %v2650, 4294901760
    %2652 = vmatpush.msra.mxu0 %v2651
    %v2653 = vand.u32 %v2348, 4294901760
    %v2654 = vsub.f32 %v2348, %v2653
    %v2655 = vand.u32 %v2654, 4294901760
    %2656 = vmatpush.msra.mxu0 %v2655
    %v2657 = vand.u32 %v2347, 4294901760
    %v2658 = vsub.f32 %v2347, %v2657
    %v2659 = vand.u32 %v2658, 4294901760
    %2660 = vmatpush.msra.mxu0 %v2659
    %v2661 = vand.u32 %v2346, 4294901760
    %v2662 = vsub.f32 %v2346, %v2661
    %v2663 = vand.u32 %v2662, 4294901760
    %2664 = vmatpush.msra.mxu0 %v2663
    %v2665 = vand.u32 %v1251, 4294901760
    %2666 = vmatmul.f32.gmra.mxu0 %v2665
    %v2667 = vpop.f32.mrf.mxu0
    %v2668 = vadd.f32 %v2599, %v2667
    %2669 = vdwg.mxu0
    %v2670 = vand.u32 %v2361, 4294901760
    %2671 = vmatpush.msra.mxu0 %v2670
    %v2672 = vand.u32 %v2360, 4294901760
    %2673 = vmatpush.msra.mxu0 %v2672
    %v2674 = vand.u32 %v2359, 4294901760
    %2675 = vmatpush.msra.mxu0 %v2674
    %v2676 = vand.u32 %v2358, 4294901760
    %2677 = vmatpush.msra.mxu0 %v2676
    %v2678 = vand.u32 %v2357, 4294901760
    %2679 = vmatpush.msra.mxu0 %v2678
    %v2680 = vand.u32 %v2356, 4294901760
    %2681 = vmatpush.msra.mxu0 %v2680
    %v2682 = vand.u32 %v2355, 4294901760
    %2683 = vmatpush.msra.mxu0 %v2682
    %v2684 = vand.u32 %v2354, 4294901760
    %2685 = vmatpush.msra.mxu0 %v2684
    %v2686 = vand.u32 %v2353, 4294901760
    %2687 = vmatpush.msra.mxu0 %v2686
    %v2688 = vand.u32 %v2352, 4294901760
    %2689 = vmatpush.msra.mxu0 %v2688
    %v2690 = vand.u32 %v2351, 4294901760
    %2691 = vmatpush.msra.mxu0 %v2690
    %v2692 = vand.u32 %v2350, 4294901760
    %2693 = vmatpush.msra.mxu0 %v2692
    %v2694 = vand.u32 %v2349, 4294901760
    %2695 = vmatpush.msra.mxu0 %v2694
    %v2696 = vand.u32 %v2348, 4294901760
    %2697 = vmatpush.msra.mxu0 %v2696
    %v2698 = vand.u32 %v2347, 4294901760
    %2699 = vmatpush.msra.mxu0 %v2698
    %v2700 = vand.u32 %v2346, 4294901760
    %2701 = vmatpush.msra.mxu0 %v2700
    %v2702 = vand.u32 %v1251, 4294901760
    %2703 = vmatmul.f32.gmra.mxu0 %v2702
    %v2704 = vpop.f32.mrf.mxu0
    %v2705 = vadd.f32 %v2668, %v2704
    %2706 = vdwg.mxu0
    %2707 = vst [vmem:[#allocation16] sm:$0xff] %v2705
    // Predicated region
    $region77: #{tpu_custom_call.1} parent=1 // pred_check
      _
    $region78: #{tpu_custom_call.1} parent=1 // pred_check_branch
      %2709 = sbr.rel (0) target = $region80
    $region79: #{tpu_custom_call.1} parent=1 // pred_region
      %2711 = vsyncadd [#allocation4], 0
      %s2713 = sshll.u32 [#allocation16], 4
      %s2714 = int_to_ptr.vmem [resolvable:$true] %s2713
      %s2715 = sshll.u32 %s9, 4
      %s2716 = int_to_ptr.hbm [resolvable:$true] %s2715
      %2718 = dma.vmem_to_hbm [thread:$0]  %s2714, 128, %s2716, [#allocation4]
    $region80: #{tpu_custom_call.1} parent=1 // pred_fallthru
      _
    // Predicated region
    $region81: #{tpu_custom_call.1} parent=1 // pred_check
      _
    $region82: #{tpu_custom_call.1} parent=1 // pred_check_branch
      %2720 = sbr.rel (0) target = $region84
    $region83: #{tpu_custom_call.1} parent=1 // pred_region
      %2722 = dma.done [#allocation4], 128
    $region84: #{tpu_custom_call.1} parent=1 // pred_fallthru
      _
    %2723 = vsyncpa [#allocation3], 1
    %2724 = vsyncpa [#allocation6], 1
    %2725 = vsyncpa [#allocation9], 1
    %2726 = vsyncpa [#allocation12], 1
    %2727 = vsyncpa [#allocation15], 1
    %2728 = vsyncpa [#allocation4], 1

</llo_original>
